<compile_context>
chip_gen: v6e
topology: v6e:2x2x1
jax: 0.10.0
libtpu: 0.0.40
codegen_flags: <defaults>
</compile_context>

<pallas_src>
import functools

import jax
import jax.numpy as jnp
from jax.experimental import pallas as pl
from jax.experimental.pallas import tpu as pltpu

K = 5          # conv kernel size
PAD = 2        # padding
EPS = 1e-5     # InstanceNorm3d default eps


def _fold_lane_groups(stats, n_groups, group_size):
    """Sum the `n_groups` lane-groups (stride `group_size`) of `stats` per channel.

    Lanes are (w, c) fused: lane = w * group_size + c.  Returns an array of the same
    shape where every lane holds sum_w stats[w * group_size + c] -- the per-channel
    total already broadcast back to every lane.  Exact f32 adds; the rotations ride
    the XLU (free slot relative to VPU/MXU).
    """
    folded = stats
    if n_groups & (n_groups - 1) == 0:            # power of two: log-step doubling
        shift, reps = group_size, 1
        while reps < n_groups:
            folded = folded + pltpu.roll(folded, shift=shift, axis=1)
            shift *= 2
            reps *= 2
    else:                                         # general: linear accumulation
        rolled = stats
        for _ in range(n_groups - 1):
            rolled = pltpu.roll(rolled, shift=group_size, axis=1)
            folded = folded + rolled
    return folded


def _input_transition_kernel(x_ref, w_ref, res_ref, o_ref, *, NB, D, H, W, Cout):
    """NB batch samples per grid step.

    x_ref:   (NB, D+4, H, K*(W+4)*Cin)  bf16 zero-padded, H-im2col'd input
    w_ref:   (K, K*(W+4)*Cin, W*Cout)   bf16 per-kd W-Toeplitz conv weights (resident)
    res_ref: (NB, D*H, W*Cout)          f32 residual (x channel-repeated), lane-dense
    o_ref:   (NB, D*H, W*Cout)          lane-dense output slab
    """
    DH = D * H
    rows = NB * DH
    kwc = x_ref.shape[-1]                # K * (W + 2*PAD) * Cin
    n_vox = D * H * W

    # ---- conv: K matmuls with a 240-deep contraction, pure f32 accumulation chain ----
    def tap(kd):
        # leading-dim slice + tile-aligned reshape (H = one sublane tile) -> no relayout
        lhs = x_ref[:, kd:kd + D, :, :].reshape(rows, kwc)
        return jnp.dot(lhs, w_ref[kd], preferred_element_type=jnp.float32)

    acc = tap(0)
    for kd in range(1, K):
        acc = acc + tap(kd)
    # conv bias intentionally omitted: InstanceNorm (no affine) cancels it exactly.

    # ---- InstanceNorm3d: per-(sample, channel) mean / var over all D*H*W voxels ----
    acc_sq = acc * acc
    stat_rows = []
    for b in range(NB):
        stat_rows.append(jnp.sum(acc[b * DH:(b + 1) * DH], axis=0, keepdims=True))
    for b in range(NB):
        stat_rows.append(jnp.sum(acc_sq[b * DH:(b + 1) * DH], axis=0, keepdims=True))
    stats = jnp.concatenate(stat_rows, axis=0)        # (2*NB, W*Cout): per-lane sums
    folded = _fold_lane_groups(stats, W, Cout)        # per-channel sums, bcast to lanes

    inv_n = 1.0 / n_vox
    mean = folded[:NB] * inv_n                        # (NB, W*Cout)
    var = folded[NB:] * inv_n - mean * mean           # biased variance (matches torch)
    # TODO(synk): for D-tiled 128^3 volumes switch to a two-pass / Welford reduction.
    rstd = jax.lax.rsqrt(var + EPS)

    # ---- normalize + residual (precomputed channel-repeat of x) + ReLU ----
    for b in range(NB):
        blk = acc[b * DH:(b + 1) * DH]
        normed = (blk - mean[b:b + 1]) * rstd[b:b + 1]
        o_ref[b] = jnp.maximum(normed + res_ref[b], 0.0).astype(o_ref.dtype)


def input_transition(x, weight, bias=None):
    """x: (N, Cin, D, H, W) NCDHW; weight: (Cout, Cin, 5, 5, 5); bias: (Cout,).

    `bias` is accepted for API fidelity but unused: InstanceNorm3d with no affine
    transform cancels a per-channel constant exactly, so the conv bias is a no-op.
    """
    N, Cin, D, H, W = x.shape
    Cout = weight.shape[0]
    assert Cout % Cin == 0, "residual repeat requires Cout % Cin == 0"
    rf = Cout // Cin
    Dp, Hp, Wp = D + 2 * PAD, H + 2 * PAD, W + 2 * PAD
    kwc = K * Wp * Cin
    wcout = W * Cout

    # samples per grid step: fill MXU rows (2 samples -> 128 rows at D=H=8) while
    # keeping >= 2 "parallel" grid steps so v7x megacore can use both TensorCores.
    NB = 2 if (N % 2 == 0 and N >= 4) else 1
    assert N % NB == 0

    # ---------------- layout prep (plain JAX glue, data movement only) ----------------
    # input: NCDHW -> NDHWC -> zero-pad spatial -> H-im2col, fuse (kh, W, Cin) on lanes
    x_cl = jnp.transpose(x, (0, 2, 3, 4, 1))                                 # (N,D,H,W,Cin)
    x_pad = jnp.pad(x_cl, ((0, 0), (PAD, PAD), (PAD, PAD), (PAD, PAD), (0, 0)))
    x_hcol = jnp.stack([x_pad[:, :, kh:kh + H] for kh in range(K)], axis=3)  # (N,Dp,H,K,Wp,Cin)
    x_hcol = x_hcol.reshape(N, Dp, H, kwc).astype(jnp.bfloat16)

    # conv weight: for each kd build the (kh, W)-Toeplitz matrix T with
    #   T[(kh*Wp + wi)*Cin + ci, w*Cout + co] = weight[co, ci, kd, kh, wi - w]  (0 outside)
    w_t = jnp.transpose(weight, (2, 3, 4, 1, 0)).astype(jnp.float32)         # (kd,kh,kw,ci,co)
    w_toe = jnp.zeros((K, K, Wp, Cin, W, Cout), jnp.float32)
    for w in range(W):
        w_toe = w_toe.at[:, :, w:w + K, :, w, :].set(w_t)
    w_toe = w_toe.reshape(K, kwc, wcout).astype(jnp.bfloat16)

    # residual: x repeated Cout/Cin times along channels, precomputed lane-dense (f32)
    res = jnp.tile(x_cl, (1, 1, 1, 1, rf)).reshape(N, D * H, wcout).astype(jnp.float32)

    kernel = functools.partial(_input_transition_kernel,
                               NB=NB, D=D, H=H, W=W, Cout=Cout)

    out2d = pl.pallas_call(
        kernel,
        out_shape=jax.ShapeDtypeStruct((N, D * H, wcout), x.dtype),
        grid_spec=pltpu.PrefetchScalarGridSpec(
            num_scalar_prefetch=0,
            grid=(N // NB,),
            in_specs=[
                pl.BlockSpec((NB, Dp, H, kwc), lambda g: (g, 0, 0, 0)),
                pl.BlockSpec((K, kwc, wcout), lambda g: (0, 0, 0)),   # resident weights
                pl.BlockSpec((NB, D * H, wcout), lambda g: (g, 0, 0)),
            ],
            out_specs=pl.BlockSpec((NB, D * H, wcout), lambda g: (g, 0, 0)),
        ),
        compiler_params=pltpu.CompilerParams(
            dimension_semantics=("parallel",)),
    )(x_hcol, w_toe, res)

    # lane layout (row = d*H + h, lane = w*Cout + co) -> back to PyTorch NCDHW
    out = out2d.reshape(N, D, H, W, Cout)
    return jnp.transpose(out, (0, 4, 1, 2, 3))


def _reference(x, weight, bias):
    """Pure-JAX reference mirroring the PyTorch module (full f32 precision)."""
    out = jax.lax.conv_general_dilated(
        x, weight, window_strides=(1, 1, 1),
        padding=((PAD, PAD),) * 3,
        dimension_numbers=("NCDHW", "OIDHW", "NCDHW"),
        precision=jax.lax.Precision.HIGHEST)
    out = out + bias.reshape(1, -1, 1, 1, 1)
    mean = out.mean(axis=(2, 3, 4), keepdims=True)
    var = ((out - mean) ** 2).mean(axis=(2, 3, 4), keepdims=True)
    out = (out - mean) / jnp.sqrt(var + EPS)
    rf = out.shape[1] // x.shape[1]
    x_rep = jnp.tile(x, (1, rf, 1, 1, 1))
    return jnp.maximum(out + x_rep, 0.0)


if __name__ == "__main__":
    key = jax.random.PRNGKey(0)
    k_x, k_w, k_b = jax.random.split(key, 3)

    N, Cin, D, H, W = 4, 4, 8, 8, 8
    Cout = 16  # repeat_factor = 4; W * Cout = 128 lanes

    x = jax.random.normal(k_x, (N, Cin, D, H, W), jnp.float32)
    weight = 0.05 * jax.random.normal(k_w, (Cout, Cin, K, K, K), jnp.float32)
    bias = 0.1 * jax.random.normal(k_b, (Cout,), jnp.float32)

    out = input_transition(x, weight, bias)
    out = jax.block_until_ready(out)

    ref = _reference(x, weight, bias)
    max_err = float(jnp.max(jnp.abs(out - ref)))
    assert out.shape == (N, Cout, D, H, W), out.shape
    # bf16 MXU operands (f32 accumulation) for the conv -> a few 1e-3 of abs error
    # vs the full-f32 reference is expected; 2e-2 gives ample margin.
    assert max_err < 2e-2, f"max abs error {max_err}"
    print("KERNEL_OK")
</pallas_src>

<mosaic_0001>
module attributes {stable_mosaic.version = 11 : i64} {
  func.func @_input_transition_kernel(%arg0: i32, %arg1: memref<2x12x8x240xbf16, #tpu.memory_space<vmem>>, %arg2: memref<5x240x128xbf16, #tpu.memory_space<vmem>>, %arg3: memref<2x64x128xf32, #tpu.memory_space<vmem>>, %arg4: memref<2x64x128xf32, #tpu.memory_space<vmem>>) attributes {dimension_semantics = [#tpu.dimension_semantics<parallel>], iteration_bounds = array<i64: 2>, scalar_prefetch = 0 : i64, scratch_operands = 0 : i64, tpu.core_type = #tpu.core_type<tc>, window_params = [{transform_indices = @transform_0, window_bounds = array<i64: 2, 12, 8, 240>}, {pipeline_mode = #tpu.pipeline_mode<synchronous>, transform_indices = @transform_1, window_bounds = array<i64: 5, 240, 128>}, {transform_indices = @transform_2, window_bounds = array<i64: 2, 64, 128>}, {transform_indices = @transform_3, window_bounds = array<i64: 2, 64, 128>}]} {
    %c0 = arith.constant 0 : index
    %c0_0 = arith.constant 0 : index
    %c0_1 = arith.constant 0 : index
    %c0_2 = arith.constant 0 : index
    %0 = vector.load %arg1[%c0, %c0_0, %c0_1, %c0_2] : memref<2x12x8x240xbf16, #tpu.memory_space<vmem>>, vector<2x8x8x240xbf16>
    %1 = vector.shape_cast %0 : vector<2x8x8x240xbf16> to vector<128x240xbf16>
    %c0_3 = arith.constant 0 : index
    %c0_4 = arith.constant 0 : index
    %c0_5 = arith.constant 0 : index
    %2 = vector.load %arg2[%c0_3, %c0_4, %c0_5] : memref<5x240x128xbf16, #tpu.memory_space<vmem>>, vector<1x240x128xbf16>
    %3 = vector.shape_cast %2 : vector<1x240x128xbf16> to vector<240x128xbf16>
    %cst = arith.constant dense<0.000000e+00> : vector<128x128xf32>
    %4 = tpu.matmul %1, %3, %cst {dimension_numbers = #tpu.dot_dimension_numbers<[1], [0], [0], [1], [0, 0, 1, 1], [], []>} : vector<128x240xbf16>, vector<240x128xbf16>, vector<128x128xf32> -> vector<128x128xf32>
    %c0_6 = arith.constant 0 : index
    %c1 = arith.constant 1 : index
    %c0_7 = arith.constant 0 : index
    %c0_8 = arith.constant 0 : index
    %5 = vector.load %arg1[%c0_6, %c1, %c0_7, %c0_8] : memref<2x12x8x240xbf16, #tpu.memory_space<vmem>>, vector<2x8x8x240xbf16>
    %6 = vector.shape_cast %5 : vector<2x8x8x240xbf16> to vector<128x240xbf16>
    %c1_9 = arith.constant 1 : index
    %c0_10 = arith.constant 0 : index
    %c0_11 = arith.constant 0 : index
    %7 = vector.load %arg2[%c1_9, %c0_10, %c0_11] : memref<5x240x128xbf16, #tpu.memory_space<vmem>>, vector<1x240x128xbf16>
    %8 = vector.shape_cast %7 : vector<1x240x128xbf16> to vector<240x128xbf16>
    %cst_12 = arith.constant dense<0.000000e+00> : vector<128x128xf32>
    %9 = tpu.matmul %6, %8, %cst_12 {dimension_numbers = #tpu.dot_dimension_numbers<[1], [0], [0], [1], [0, 0, 1, 1], [], []>} : vector<128x240xbf16>, vector<240x128xbf16>, vector<128x128xf32> -> vector<128x128xf32>
    %10 = arith.addf %4, %9 : vector<128x128xf32>
    %c0_13 = arith.constant 0 : index
    %c2 = arith.constant 2 : index
    %c0_14 = arith.constant 0 : index
    %c0_15 = arith.constant 0 : index
    %11 = vector.load %arg1[%c0_13, %c2, %c0_14, %c0_15] : memref<2x12x8x240xbf16, #tpu.memory_space<vmem>>, vector<2x8x8x240xbf16>
    %12 = vector.shape_cast %11 : vector<2x8x8x240xbf16> to vector<128x240xbf16>
    %c2_16 = arith.constant 2 : index
    %c0_17 = arith.constant 0 : index
    %c0_18 = arith.constant 0 : index
    %13 = vector.load %arg2[%c2_16, %c0_17, %c0_18] : memref<5x240x128xbf16, #tpu.memory_space<vmem>>, vector<1x240x128xbf16>
    %14 = vector.shape_cast %13 : vector<1x240x128xbf16> to vector<240x128xbf16>
    %cst_19 = arith.constant dense<0.000000e+00> : vector<128x128xf32>
    %15 = tpu.matmul %12, %14, %cst_19 {dimension_numbers = #tpu.dot_dimension_numbers<[1], [0], [0], [1], [0, 0, 1, 1], [], []>} : vector<128x240xbf16>, vector<240x128xbf16>, vector<128x128xf32> -> vector<128x128xf32>
    %16 = arith.addf %10, %15 : vector<128x128xf32>
    %c0_20 = arith.constant 0 : index
    %c3 = arith.constant 3 : index
    %c0_21 = arith.constant 0 : index
    %c0_22 = arith.constant 0 : index
    %17 = vector.load %arg1[%c0_20, %c3, %c0_21, %c0_22] : memref<2x12x8x240xbf16, #tpu.memory_space<vmem>>, vector<2x8x8x240xbf16>
    %18 = vector.shape_cast %17 : vector<2x8x8x240xbf16> to vector<128x240xbf16>
    %c3_23 = arith.constant 3 : index
    %c0_24 = arith.constant 0 : index
    %c0_25 = arith.constant 0 : index
    %19 = vector.load %arg2[%c3_23, %c0_24, %c0_25] : memref<5x240x128xbf16, #tpu.memory_space<vmem>>, vector<1x240x128xbf16>
    %20 = vector.shape_cast %19 : vector<1x240x128xbf16> to vector<240x128xbf16>
    %cst_26 = arith.constant dense<0.000000e+00> : vector<128x128xf32>
    %21 = tpu.matmul %18, %20, %cst_26 {dimension_numbers = #tpu.dot_dimension_numbers<[1], [0], [0], [1], [0, 0, 1, 1], [], []>} : vector<128x240xbf16>, vector<240x128xbf16>, vector<128x128xf32> -> vector<128x128xf32>
    %22 = arith.addf %16, %21 : vector<128x128xf32>
    %c0_27 = arith.constant 0 : index
    %c4 = arith.constant 4 : index
    %c0_28 = arith.constant 0 : index
    %c0_29 = arith.constant 0 : index
    %23 = vector.load %arg1[%c0_27, %c4, %c0_28, %c0_29] : memref<2x12x8x240xbf16, #tpu.memory_space<vmem>>, vector<2x8x8x240xbf16>
    %24 = vector.shape_cast %23 : vector<2x8x8x240xbf16> to vector<128x240xbf16>
    %c4_30 = arith.constant 4 : index
    %c0_31 = arith.constant 0 : index
    %c0_32 = arith.constant 0 : index
    %25 = vector.load %arg2[%c4_30, %c0_31, %c0_32] : memref<5x240x128xbf16, #tpu.memory_space<vmem>>, vector<1x240x128xbf16>
    %26 = vector.shape_cast %25 : vector<1x240x128xbf16> to vector<240x128xbf16>
    %cst_33 = arith.constant dense<0.000000e+00> : vector<128x128xf32>
    %27 = tpu.matmul %24, %26, %cst_33 {dimension_numbers = #tpu.dot_dimension_numbers<[1], [0], [0], [1], [0, 0, 1, 1], [], []>} : vector<128x240xbf16>, vector<240x128xbf16>, vector<128x128xf32> -> vector<128x128xf32>
    %28 = arith.addf %22, %27 : vector<128x128xf32>
    %29 = arith.mulf %28, %28 : vector<128x128xf32>
    %30 = vector.extract_strided_slice %28 {offsets = [0, 0], sizes = [64, 128], strides = [1, 1]} : vector<128x128xf32> to vector<64x128xf32>
    %cst_34 = arith.constant dense<0.000000e+00> : vector<128xf32>
    %31 = vector.multi_reduction <add>, %30, %cst_34 [0] : vector<64x128xf32> to vector<128xf32>
    %32 = vector.shape_cast %31 : vector<128xf32> to vector<1x128xf32>
    %33 = vector.extract_strided_slice %28 {offsets = [64, 0], sizes = [64, 128], strides = [1, 1]} : vector<128x128xf32> to vector<64x128xf32>
    %cst_35 = arith.constant dense<0.000000e+00> : vector<128xf32>
    %34 = vector.multi_reduction <add>, %33, %cst_35 [0] : vector<64x128xf32> to vector<128xf32>
    %35 = vector.shape_cast %34 : vector<128xf32> to vector<1x128xf32>
    %36 = vector.extract_strided_slice %29 {offsets = [0, 0], sizes = [64, 128], strides = [1, 1]} : vector<128x128xf32> to vector<64x128xf32>
    %cst_36 = arith.constant dense<0.000000e+00> : vector<128xf32>
    %37 = vector.multi_reduction <add>, %36, %cst_36 [0] : vector<64x128xf32> to vector<128xf32>
    %38 = vector.shape_cast %37 : vector<128xf32> to vector<1x128xf32>
    %39 = vector.extract_strided_slice %29 {offsets = [64, 0], sizes = [64, 128], strides = [1, 1]} : vector<128x128xf32> to vector<64x128xf32>
    %cst_37 = arith.constant dense<0.000000e+00> : vector<128xf32>
    %40 = vector.multi_reduction <add>, %39, %cst_37 [0] : vector<64x128xf32> to vector<128xf32>
    %41 = vector.shape_cast %40 : vector<128xf32> to vector<1x128xf32>
    %42 = tpu.concatenate %32, %35, %38, %41 in 0 : vector<1x128xf32>, vector<1x128xf32>, vector<1x128xf32>, vector<1x128xf32> -> vector<4x128xf32>
    %c16_i32 = arith.constant 16 : i32
    %43 = tpu.dynamic_rotate %42 by %c16_i32 dim 1 : vector<4x128xf32>, i32 -> vector<4x128xf32>
    %44 = arith.addf %42, %43 : vector<4x128xf32>
    %c32_i32 = arith.constant 32 : i32
    %45 = tpu.dynamic_rotate %44 by %c32_i32 dim 1 : vector<4x128xf32>, i32 -> vector<4x128xf32>
    %46 = arith.addf %44, %45 : vector<4x128xf32>
    %c64_i32 = arith.constant 64 : i32
    %47 = tpu.dynamic_rotate %46 by %c64_i32 dim 1 : vector<4x128xf32>, i32 -> vector<4x128xf32>
    %48 = arith.addf %46, %47 : vector<4x128xf32>
    %49 = vector.extract_strided_slice %48 {offsets = [0, 0], sizes = [2, 128], strides = [1, 1]} : vector<4x128xf32> to vector<2x128xf32>
    %cst_38 = arith.constant 0.001953125 : f32
    %50 = vector.broadcast %cst_38 : f32 to vector<2x128xf32>
    %51 = arith.mulf %49, %50 : vector<2x128xf32>
    %52 = vector.extract_strided_slice %48 {offsets = [2, 0], sizes = [2, 128], strides = [1, 1]} : vector<4x128xf32> to vector<2x128xf32>
    %cst_39 = arith.constant 0.001953125 : f32
    %53 = vector.broadcast %cst_39 : f32 to vector<2x128xf32>
    %54 = arith.mulf %52, %53 : vector<2x128xf32>
    %55 = arith.mulf %51, %51 : vector<2x128xf32>
    %56 = arith.subf %54, %55 : vector<2x128xf32>
    %cst_40 = arith.constant 9.99999974E-6 : f32
    %57 = vector.broadcast %cst_40 : f32 to vector<2x128xf32>
    %58 = arith.addf %56, %57 : vector<2x128xf32>
    %59 = math.rsqrt %58 : vector<2x128xf32>
    %60 = vector.extract_strided_slice %28 {offsets = [0, 0], sizes = [64, 128], strides = [1, 1]} : vector<128x128xf32> to vector<64x128xf32>
    %61 = vector.extract_strided_slice %51 {offsets = [0, 0], sizes = [1, 128], strides = [1, 1]} : vector<2x128xf32> to vector<1x128xf32>
    %62 = vector.broadcast %61 : vector<1x128xf32> to vector<64x128xf32>
    %63 = arith.subf %60, %62 : vector<64x128xf32>
    %64 = vector.extract_strided_slice %59 {offsets = [0, 0], sizes = [1, 128], strides = [1, 1]} : vector<2x128xf32> to vector<1x128xf32>
    %65 = vector.broadcast %64 : vector<1x128xf32> to vector<64x128xf32>
    %66 = arith.mulf %63, %65 : vector<64x128xf32>
    %c0_41 = arith.constant 0 : index
    %c0_42 = arith.constant 0 : index
    %c0_43 = arith.constant 0 : index
    %67 = vector.load %arg3[%c0_41, %c0_42, %c0_43] : memref<2x64x128xf32, #tpu.memory_space<vmem>>, vector<1x64x128xf32>
    %68 = vector.shape_cast %67 : vector<1x64x128xf32> to vector<64x128xf32>
    %69 = arith.addf %66, %68 : vector<64x128xf32>
    %cst_44 = arith.constant 0.000000e+00 : f32
    %70 = vector.broadcast %cst_44 : f32 to vector<64x128xf32>
    %71 = arith.maximumf %69, %70 : vector<64x128xf32>
    %c0_45 = arith.constant 0 : index
    %c0_46 = arith.constant 0 : index
    %c0_47 = arith.constant 0 : index
    %72 = vector.load %arg4[%c0_45, %c0_46, %c0_47] : memref<2x64x128xf32, #tpu.memory_space<vmem>>, vector<1x64x128xf32>
    %73 = vector.shape_cast %72 : vector<1x64x128xf32> to vector<64x128xf32>
    %74 = vector.shape_cast %71 : vector<64x128xf32> to vector<1x64x128xf32>
    tpu.vector_store %arg4[%c0_45, %c0_46, %c0_47], %74 {strides = array<i32>} : memref<2x64x128xf32, #tpu.memory_space<vmem>>, vector<1x64x128xf32>,
    %75 = vector.extract_strided_slice %28 {offsets = [64, 0], sizes = [64, 128], strides = [1, 1]} : vector<128x128xf32> to vector<64x128xf32>
    %76 = vector.extract_strided_slice %51 {offsets = [1, 0], sizes = [1, 128], strides = [1, 1]} : vector<2x128xf32> to vector<1x128xf32>
    %77 = vector.broadcast %76 : vector<1x128xf32> to vector<64x128xf32>
    %78 = arith.subf %75, %77 : vector<64x128xf32>
    %79 = vector.extract_strided_slice %59 {offsets = [1, 0], sizes = [1, 128], strides = [1, 1]} : vector<2x128xf32> to vector<1x128xf32>
    %80 = vector.broadcast %79 : vector<1x128xf32> to vector<64x128xf32>
    %81 = arith.mulf %78, %80 : vector<64x128xf32>
    %c1_48 = arith.constant 1 : index
    %c0_49 = arith.constant 0 : index
    %c0_50 = arith.constant 0 : index
    %82 = vector.load %arg3[%c1_48, %c0_49, %c0_50] : memref<2x64x128xf32, #tpu.memory_space<vmem>>, vector<1x64x128xf32>
    %83 = vector.shape_cast %82 : vector<1x64x128xf32> to vector<64x128xf32>
    %84 = arith.addf %81, %83 : vector<64x128xf32>
    %cst_51 = arith.constant 0.000000e+00 : f32
    %85 = vector.broadcast %cst_51 : f32 to vector<64x128xf32>
    %86 = arith.maximumf %84, %85 : vector<64x128xf32>
    %c1_52 = arith.constant 1 : index
    %c0_53 = arith.constant 0 : index
    %c0_54 = arith.constant 0 : index
    %87 = vector.load %arg4[%c1_52, %c0_53, %c0_54] : memref<2x64x128xf32, #tpu.memory_space<vmem>>, vector<1x64x128xf32>
    %88 = vector.shape_cast %87 : vector<1x64x128xf32> to vector<64x128xf32>
    %89 = vector.shape_cast %86 : vector<64x128xf32> to vector<1x64x128xf32>
    tpu.vector_store %arg4[%c1_52, %c0_53, %c0_54], %89 {strides = array<i32>} : memref<2x64x128xf32, #tpu.memory_space<vmem>>, vector<1x64x128xf32>,
    return
  }
  func.func @transform_0(%arg0: i32) -> (i32, i32, i32, i32) {
    %c0_i32 = arith.constant 0 : i32
    %c0_i32_0 = arith.constant 0 : i32
    %c0_i32_1 = arith.constant 0 : i32
    %c0_i32_2 = arith.constant 0 : i32
    return %arg0, %c0_i32, %c0_i32_0, %c0_i32_1 : i32, i32, i32, i32
  }
  func.func @transform_1(%arg0: i32) -> (i32, i32, i32) {
    %c0_i32 = arith.constant 0 : i32
    %c0_i32_0 = arith.constant 0 : i32
    %c0_i32_1 = arith.constant 0 : i32
    %c0_i32_2 = arith.constant 0 : i32
    return %c0_i32, %c0_i32_0, %c0_i32_1 : i32, i32, i32
  }
  func.func @transform_2(%arg0: i32) -> (i32, i32, i32) {
    %c0_i32 = arith.constant 0 : i32
    %c0_i32_0 = arith.constant 0 : i32
    %c0_i32_1 = arith.constant 0 : i32
    return %arg0, %c0_i32, %c0_i32_0 : i32, i32, i32
  }
  func.func @transform_3(%arg0: i32) -> (i32, i32, i32) {
    %c0_i32 = arith.constant 0 : i32
    %c0_i32_0 = arith.constant 0 : i32
    %c0_i32_1 = arith.constant 0 : i32
    return %arg0, %c0_i32, %c0_i32_0 : i32, i32, i32
  }
}

</mosaic_0001>

<llo_original>
// kernel: tpu_custom_call.1
$region0: #{tpu_custom_call.1}
  #allocation0 [shape = 'u32[]', space=smem, size = 0x4, offset = 0x4, fixed_abs, tag = 'smem constant byte address 0x4 - core index']
  #allocation1 [shape = 'u32[144,128]{1,0:T(1,128)}', space=vmem, size = 0x12000, scoped, tag = 'internal scratch']
  %s0 = inlined_call_operand.hbm [shape: bf16[4,12,8,240], index: 0, kind: input, shape index: {}]
  %s1 = inlined_call_operand.hbm [shape: bf16[5,240,128], index: 1, kind: input, shape index: {}]
  %s2 = inlined_call_operand.hbm [shape: f32[4,64,128], index: 2, kind: input, shape index: {}]
  %s3 = inlined_call_operand.hbm [shape: f32[4,64,128], index: 3, kind: output, shape index: {}]
  %s4 = sld [smem:[#allocation0]]
  $region57: #{tpu_custom_call.1} parent=0
    _
  %s6 = ssub.s32 1, %s4
  %s7 = scalar_select 0, %s6, %s4
  $region1: #{tpu_custom_call.1} parent=0
    #allocation2 [shape = 'u8[196608]{0}', space=vmem, size = 0x30000, scoped, tag = 'input window, operand 0']
    #allocation3 [shape = 's32[2]{0}', space=sflag, size = 0x8, scoped, tag = 'scoped memory for tpu_custom_call.1']
    #allocation4 [shape = 's32[2]{0}', space=sflag, size = 0x8, scoped, tag = 'scoped memory for tpu_custom_call.1']
    #allocation5 [shape = 'u8[307200]{0}', space=vmem, size = 0x4b000, scoped, tag = 'input window, operand 1, single buffered']
    #allocation6 [shape = 's32[1]{0}', space=sflag, size = 0x4, scoped, tag = 'scoped memory for tpu_custom_call.1']
    #allocation7 [shape = 'u8[131072]{0}', space=vmem, size = 0x20000, scoped, tag = 'input window, operand 2']
    #allocation8 [shape = 'u8[131072]{0}', space=vmem, size = 0x20000, scoped, tag = 'output window, operand 0']
    %8 = vsyncpa [#allocation3], 0
    %s9 = scalar_lea.sflag [#allocation3], 1
    %10 = vsyncpa %s9, 0
    %11 = vsyncpa [#allocation6], 0
    %12 = vsyncpa [#allocation4], 0
    %s13 = scalar_lea.sflag [#allocation4], 1
    %14 = vsyncpa %s13, 0
    loop: start=0, step=1, limit=4
    $region2: #{tpu_custom_call.1} parent=1 // loop_pre_header
      _
    $region3: #{tpu_custom_call.1} parent=1 // loop_header
      %s16 = sphi 0, %s20
      %p17 = scmp.ge.s32.totalorder %s16, 4
      %s26 = sphi 0, %s28
      %s29 = sphi 0, %s26
      %s30 = sphi 0, %s29
      %s46 = sphi 0, %s30
      %s50 = sphi 0, %s50
      %s52 = sphi 0, %s50
      %s53 = sphi 0, %s52
      %s67 = sphi 0, %s53
      %s73 = sphi 0, %s75
      %s76 = sphi 0, %s73
      %s77 = sphi 0, %s76
      %s93 = sphi 0, %s77
      %s99 = sphi 0, %s101
      %s102 = sphi 0, %s99
      %s103 = sphi 0, %s102
      %s119 = sphi 0, %s103
    $region4: #{tpu_custom_call.1} parent=1 // loop_header_branch
      %19 = sbr.rel (%p17) target = $region8
    $region5: #{tpu_custom_call.1} parent=1 // loop_body
      %s21 = ssub.s32 %s16, 1
      %s22 = ssub.s32 %s16, 2
      %s23 = sadd.s32 %s16, 1
      %s24 = ssub.s32 %s16, %s23
      %p25 = scmp.eq.s32.totalorder %s24, 0
      %s27 = sadd.s32 %s26, 1
      %s28 = scalar_select %p25, %s26, %s27
      %p31 = pneg %p25
      %p32 = scmp.eq.s32.totalorder %s16, 1
      %p33 = por %p31, %p32
      %p34 = scmp.ne.s32.totalorder %s26, %s29
      %p35 = scmp.eq.s32.totalorder %s16, 0
      %p36 = por %p34, %p35
      %p37 = scmp.ne.s32.totalorder %s26, %s29
      %p38 = scmp.eq.s32.totalorder %s21, 1
      %p39 = por %p37, %p38
      %p40 = scmp.ne.s32.totalorder %s29, %s30
      %p41 = scmp.eq.s32.totalorder %s21, 0
      %p42 = por %p40, %p41
      %p43 = scmp.ne.s32.totalorder %s29, %s30
      %p44 = scmp.eq.s32.totalorder %s22, 1
      %p45 = por %p43, %p44
      %p47 = scmp.ne.s32.totalorder %s30, %s46
      %p48 = scmp.eq.s32.totalorder %s22, 0
      %p49 = por %p47, %p48
      %s51 = sadd.s32 %s50, 1
      %p54 = scmp.eq.s32.totalorder %s16, 1
      %p55 = scmp.ne.s32.totalorder %s50, %s52
      %p56 = scmp.eq.s32.totalorder %s16, 0
      %p57 = por %p55, %p56
      %p58 = scmp.ne.s32.totalorder %s50, %s52
      %p59 = scmp.eq.s32.totalorder %s21, 1
      %p60 = por %p58, %p59
      %p61 = scmp.ne.s32.totalorder %s52, %s53
      %p62 = scmp.eq.s32.totalorder %s21, 0
      %p63 = por %p61, %p62
      %p64 = scmp.ne.s32.totalorder %s52, %s53
      %p65 = scmp.eq.s32.totalorder %s22, 1
      %p66 = por %p64, %p65
      %p68 = scmp.ne.s32.totalorder %s53, %s67
      %p69 = scmp.eq.s32.totalorder %s22, 0
      %p70 = por %p68, %p69
      %s71 = ssub.s32 %s16, %s23
      %p72 = scmp.eq.s32.totalorder %s71, 0
      %s74 = sadd.s32 %s73, 1
      %s75 = scalar_select %p72, %s73, %s74
      %p78 = pneg %p72
      %p79 = scmp.eq.s32.totalorder %s16, 1
      %p80 = por %p78, %p79
      %p81 = scmp.ne.s32.totalorder %s73, %s76
      %p82 = scmp.eq.s32.totalorder %s16, 0
      %p83 = por %p81, %p82
      %p84 = scmp.ne.s32.totalorder %s73, %s76
      %p85 = scmp.eq.s32.totalorder %s21, 1
      %p86 = por %p84, %p85
      %p87 = scmp.ne.s32.totalorder %s76, %s77
      %p88 = scmp.eq.s32.totalorder %s21, 0
      %p89 = por %p87, %p88
      %p90 = scmp.ne.s32.totalorder %s76, %s77
      %p91 = scmp.eq.s32.totalorder %s22, 1
      %p92 = por %p90, %p91
      %p94 = scmp.ne.s32.totalorder %s77, %s93
      %p95 = scmp.eq.s32.totalorder %s22, 0
      %p96 = por %p94, %p95
      %s97 = ssub.s32 %s16, %s23
      %p98 = scmp.eq.s32.totalorder %s97, 0
      %s100 = sadd.s32 %s99, 1
      %s101 = scalar_select %p98, %s99, %s100
      %p104 = pneg %p98
      %p105 = scmp.eq.s32.totalorder %s16, 1
      %p106 = por %p104, %p105
      %p107 = scmp.ne.s32.totalorder %s99, %s102
      %p108 = scmp.eq.s32.totalorder %s16, 0
      %p109 = por %p107, %p108
      %p110 = scmp.ne.s32.totalorder %s99, %s102
      %p111 = scmp.eq.s32.totalorder %s21, 1
      %p112 = por %p110, %p111
      %p113 = scmp.ne.s32.totalorder %s102, %s103
      %p114 = scmp.eq.s32.totalorder %s21, 0
      %p115 = por %p113, %p114
      %p116 = scmp.ne.s32.totalorder %s102, %s103
      %p117 = scmp.eq.s32.totalorder %s22, 1
      %p118 = por %p116, %p117
      %p120 = scmp.ne.s32.totalorder %s103, %s119
      %p121 = scmp.eq.s32.totalorder %s22, 0
      %p122 = por %p120, %p121
      %p123 = scmp.le.s32.totalorder 1, %s16
      %p124 = scmp.lt.s32.totalorder %s16, 3
      %p125 = pnand %p123, %p124
      %p126 = pneg %p125
      // Predicated region
      $region9: #{tpu_custom_call.1} parent=5 // pred_check
        _
      $region10: #{tpu_custom_call.1} parent=5 // pred_check_branch
        %128 = sbr.rel (%p125) target = $region12
      $region11: #{tpu_custom_call.1} parent=5 // pred_region
        %s129 = ssub.s32 %s16, 1
        // Predicated region
        $region13: #{tpu_custom_call.1} parent=11 // pred_check
          %p130 = pneg %p63
        $region14: #{tpu_custom_call.1} parent=11 // pred_check_branch
          %132 = sbr.rel (%p130) target = $region16
        $region15: #{tpu_custom_call.1} parent=11 // pred_region
          %s134 = ssub.s32 9600, 9600
          %135 = vsyncadd [#allocation6], %s134
          %s136 = sshll.u32 [#allocation5], 4
          %s137 = int_to_ptr.vmem [resolvable:$true] %s136
          %142 = dma.hbm_to_vmem [thread:$0]  %s1, 9600, %s137, [#allocation6], 64, 64, 4
        $region16: #{tpu_custom_call.1} parent=11 // pred_fallthru
          _
      $region12: #{tpu_custom_call.1} parent=5 // pred_fallthru
        _
      %p143 = scmp.lt.s32.totalorder %s16, 2
      // Predicated region
      $region17: #{tpu_custom_call.1} parent=5 // pred_check
        %p144 = pneg %p143
      $region18: #{tpu_custom_call.1} parent=5 // pred_check_branch
        %146 = sbr.rel (%p144) target = $region20
      $region19: #{tpu_custom_call.1} parent=5 // pred_region
        // Predicated region
        $region21: #{tpu_custom_call.1} parent=19 // pred_check
          %p147 = pneg %p36
        $region22: #{tpu_custom_call.1} parent=19 // pred_check_branch
          %149 = sbr.rel (%p147) target = $region24
        $region23: #{tpu_custom_call.1} parent=19 // pred_region
          %s150 = sand.u32 %s16, 1
          %s151 = scalar_lea.sflag [#allocation3], %s150
          %s152 = sand.u32 %s26, 1
          %s153 = smul.addr %s152, 192
          %s154 = scalar_lea.vmem [#allocation2], %s153
          %s155 = smul.u32 2, %s16
          %s157 = ssub.s32 3072, 3072
          %158 = vsyncadd %s151, %s157
          %s159 = smul.addr %s155, 24
          %s160 = smul.addr %s159, 64
          %s161 = scalar_lea.hbm %s0, %s160
          %s162 = sshll.u32 %s154, 4
          %s163 = int_to_ptr.vmem [resolvable:$true] %s162
          %168 = dma.hbm_to_vmem [thread:$0]  %s161, 3072, %s163, %s151, 128, 128, 8
        $region24: #{tpu_custom_call.1} parent=19 // pred_fallthru
          _
        // Predicated region
        $region25: #{tpu_custom_call.1} parent=19 // pred_check
          %p169 = pneg %p83
        $region26: #{tpu_custom_call.1} parent=19 // pred_check_branch
          %171 = sbr.rel (%p169) target = $region28
        $region27: #{tpu_custom_call.1} parent=19 // pred_region
          %s172 = sand.u32 %s16, 1
          %s173 = scalar_lea.sflag [#allocation3], %s172
          %s174 = sand.u32 %s73, 1
          %s175 = smul.addr %s174, 128
          %s176 = scalar_lea.vmem [#allocation7], %s175
          %s177 = smul.u32 2, %s16
          %s179 = ssub.s32 2048, 2048
          %180 = vsyncadd %s173, %s179
          %s181 = smul.addr %s177, 8
          %s182 = smul.addr %s181, 128
          %s183 = scalar_lea.hbm %s2, %s182
          %s184 = sshll.u32 %s176, 4
          %s185 = int_to_ptr.vmem [resolvable:$true] %s184
          %190 = dma.hbm_to_vmem [thread:$0]  %s183, 2048, %s185, %s173, 128, 128, 8
        $region28: #{tpu_custom_call.1} parent=19 // pred_fallthru
          _
      $region20: #{tpu_custom_call.1} parent=5 // pred_fallthru
        _
      %p191 = scmp.le.s32.totalorder 1, %s16
      %p192 = scmp.lt.s32.totalorder %s16, 3
      %p193 = pnand %p191, %p192
      %p194 = pneg %p193
      // Predicated region
      $region29: #{tpu_custom_call.1} parent=5 // pred_check
        _
      $region30: #{tpu_custom_call.1} parent=5 // pred_check_branch
        %196 = sbr.rel (%p193) target = $region32
      $region31: #{tpu_custom_call.1} parent=5 // pred_region
        %s197 = ssub.s32 %s16, 1
        %s198 = sand.u32 %s21, 1
        %s199 = scalar_lea.sflag [#allocation3], %s198
        %s200 = sand.u32 %s29, 1
        %s201 = smul.addr %s200, 192
        %s202 = scalar_lea.vmem [#allocation2], %s201
        // Predicated region
        $region33: #{tpu_custom_call.1} parent=31 // pred_check
          %p203 = pneg %p42
        $region34: #{tpu_custom_call.1} parent=31 // pred_check_branch
          %205 = sbr.rel (%p203) target = $region36
        $region35: #{tpu_custom_call.1} parent=31 // pred_region
          %206 = dma.done %s199, 3072
        $region36: #{tpu_custom_call.1} parent=31 // pred_fallthru
          _
        // Predicated region
        $region37: #{tpu_custom_call.1} parent=31 // pred_check
          %p207 = pneg %p63
        $region38: #{tpu_custom_call.1} parent=31 // pred_check_branch
          %209 = sbr.rel (%p207) target = $region40
        $region39: #{tpu_custom_call.1} parent=31 // pred_region
          %210 = dma.done [#allocation6], 9600
        $region40: #{tpu_custom_call.1} parent=31 // pred_fallthru
          _
        %s211 = sand.u32 %s21, 1
        %s212 = scalar_lea.sflag [#allocation3], %s211
        %s213 = sand.u32 %s76, 1
        %s214 = smul.addr %s213, 128
        %s215 = scalar_lea.vmem [#allocation7], %s214
        // Predicated region
        $region41: #{tpu_custom_call.1} parent=31 // pred_check
          %p216 = pneg %p89
        $region42: #{tpu_custom_call.1} parent=31 // pred_check_branch
          %218 = sbr.rel (%p216) target = $region44
        $region43: #{tpu_custom_call.1} parent=31 // pred_region
          %219 = dma.done %s212, 2048
        $region44: #{tpu_custom_call.1} parent=31 // pred_fallthru
          _
        %s220 = sand.u32 %s21, 1
        %s221 = scalar_lea.sflag [#allocation3], %s220
        %s222 = sand.u32 %s29, 1
        %s223 = smul.addr %s222, 192
        %s224 = scalar_lea.vmem [#allocation2], %s223
        %p225 = pneg %p42
        %p226 = pneg %p39
        %p227 = pneg %p63
        %p228 = pneg %p60
        %s229 = sand.u32 %s21, 1
        %s230 = scalar_lea.sflag [#allocation3], %s229
        %s231 = sand.u32 %s76, 1
        %s232 = smul.addr %s231, 128
        %s233 = scalar_lea.vmem [#allocation7], %s232
        %p234 = pneg %p89
        %p235 = pneg %p86
        %p236 = pneg %p115
        %p237 = pneg %p112
        %s238 = sand.u32 %s102, 1
        %s239 = scalar_lea.sflag [#allocation4], %s238
        %s240 = sand.u32 %s102, 1
        %s241 = smul.addr %s240, 128
        %s242 = scalar_lea.vmem [#allocation8], %s241
        %s243 = smul.u32 2, %s21
        %s244 = smul.u32 2, %s21
        %s245 = smul.u32 2, %s21
        %v247 = vld [vmem:[%s202] sm:$0xff]
        %v248 = vld [vmem:[%s202 + $0x8] sm:$0xff]
        %v249 = vld [vmem:[%s202 + $0x10] sm:$0xff]
        %v250 = vld [vmem:[%s202 + $0x18] sm:$0xff]
        %v251 = vld [vmem:[%s202 + $0x20] sm:$0xff]
        %v252 = vld [vmem:[%s202 + $0x28] sm:$0xff]
        %v253 = vld [vmem:[%s202 + $0x30] sm:$0xff]
        %v254 = vld [vmem:[%s202 + $0x38] sm:$0xff]
        %v255 = vld [vmem:[%s202 + $0x60] sm:$0xff]
        %v256 = vld [vmem:[%s202 + $0x68] sm:$0xff]
        %v257 = vld [vmem:[%s202 + $0x70] sm:$0xff]
        %v258 = vld [vmem:[%s202 + $0x78] sm:$0xff]
        %v259 = vld [vmem:[%s202 + $0x80] sm:$0xff]
        %v260 = vld [vmem:[%s202 + $0x88] sm:$0xff]
        %v261 = vld [vmem:[%s202 + $0x90] sm:$0xff]
        %v262 = vld [vmem:[%s202 + $0x98] sm:$0xff]
        %v263 = vld [vmem:[#allocation5] sm:$0xf]
        %v264 = vld [vmem:[#allocation5 + $0x4] sm:$0xf]
        %v265 = vld [vmem:[#allocation5 + $0x8] sm:$0xf]
        %v266 = vld [vmem:[#allocation5 + $0xc] sm:$0xf]
        %v267 = vld [vmem:[#allocation5 + $0x10] sm:$0xf]
        %v268 = vld [vmem:[#allocation5 + $0x14] sm:$0xf]
        %v269 = vld [vmem:[#allocation5 + $0x18] sm:$0xf]
        %v270 = vld [vmem:[#allocation5 + $0x1c] sm:$0xf]
        %v271 = vld [vmem:[#allocation5 + $0x20] sm:$0xf]
        %v272 = vld [vmem:[#allocation5 + $0x24] sm:$0xf]
        %v273 = vld [vmem:[#allocation5 + $0x28] sm:$0xf]
        %v274 = vld [vmem:[#allocation5 + $0x2c] sm:$0xf]
        %v275 = vld [vmem:[#allocation5 + $0x30] sm:$0xf]
        %v276 = vld [vmem:[#allocation5 + $0x34] sm:$0xf]
        %v277 = vld [vmem:[#allocation5 + $0x38] sm:$0xf]
        %v278 = vld [vmem:[#allocation5 + $0x3c] sm:$0xf]
        %v279 = vld [vmem:[#allocation5 + $0x40] sm:$0xf]
        %v280 = vld [vmem:[#allocation5 + $0x44] sm:$0xf]
        %v281 = vld [vmem:[#allocation5 + $0x48] sm:$0xf]
        %v282 = vld [vmem:[#allocation5 + $0x4c] sm:$0xf]
        %v283 = vld [vmem:[#allocation5 + $0x50] sm:$0xf]
        %v284 = vld [vmem:[#allocation5 + $0x54] sm:$0xf]
        %v285 = vld [vmem:[#allocation5 + $0x58] sm:$0xf]
        %v286 = vld [vmem:[#allocation5 + $0x5c] sm:$0xf]
        %v287 = vld [vmem:[#allocation5 + $0x60] sm:$0xf]
        %v288 = vld [vmem:[#allocation5 + $0x64] sm:$0xf]
        %v289 = vld [vmem:[#allocation5 + $0x68] sm:$0xf]
        %v290 = vld [vmem:[#allocation5 + $0x6c] sm:$0xf]
        %v291 = vld [vmem:[#allocation5 + $0x70] sm:$0xf]
        %v292 = vld [vmem:[#allocation5 + $0x74] sm:$0xf]
        %s293 = scalar_lea.vmem %s202, 8 [#allocation2]
        %v294 = vld [vmem:[%s293] sm:$0xff]
        %v295 = vld [vmem:[%s293 + $0x8] sm:$0xff]
        %v296 = vld [vmem:[%s293 + $0x10] sm:$0xff]
        %v297 = vld [vmem:[%s293 + $0x18] sm:$0xff]
        %v298 = vld [vmem:[%s293 + $0x20] sm:$0xff]
        %v299 = vld [vmem:[%s293 + $0x28] sm:$0xff]
        %v300 = vld [vmem:[%s293 + $0x30] sm:$0xff]
        %v301 = vld [vmem:[%s293 + $0x38] sm:$0xff]
        %v302 = vld [vmem:[%s293 + $0x60] sm:$0xff]
        %v303 = vld [vmem:[%s293 + $0x68] sm:$0xff]
        %v304 = vld [vmem:[%s293 + $0x70] sm:$0xff]
        %v305 = vld [vmem:[%s293 + $0x78] sm:$0xff]
        %v306 = vld [vmem:[%s293 + $0x80] sm:$0xff]
        %v307 = vld [vmem:[%s293 + $0x88] sm:$0xff]
        %v308 = vld [vmem:[%s293 + $0x90] sm:$0xff]
        %v309 = vld [vmem:[%s293 + $0x98] sm:$0xff]
        %s310 = scalar_lea.vmem [#allocation5], 120
        %v311 = vld [vmem:[%s310] sm:$0xf]
        %v312 = vld [vmem:[%s310 + $0x4] sm:$0xf]
        %v313 = vld [vmem:[%s310 + $0x8] sm:$0xf]
        %v314 = vld [vmem:[%s310 + $0xc] sm:$0xf]
        %v315 = vld [vmem:[%s310 + $0x10] sm:$0xf]
        %v316 = vld [vmem:[%s310 + $0x14] sm:$0xf]
        %v317 = vld [vmem:[%s310 + $0x18] sm:$0xf]
        %v318 = vld [vmem:[%s310 + $0x1c] sm:$0xf]
        %v319 = vld [vmem:[%s310 + $0x20] sm:$0xf]
        %v320 = vld [vmem:[%s310 + $0x24] sm:$0xf]
        %v321 = vld [vmem:[%s310 + $0x28] sm:$0xf]
        %v322 = vld [vmem:[%s310 + $0x2c] sm:$0xf]
        %v323 = vld [vmem:[%s310 + $0x30] sm:$0xf]
        %v324 = vld [vmem:[%s310 + $0x34] sm:$0xf]
        %v325 = vld [vmem:[%s310 + $0x38] sm:$0xf]
        %v326 = vld [vmem:[%s310 + $0x3c] sm:$0xf]
        %v327 = vld [vmem:[%s310 + $0x40] sm:$0xf]
        %v328 = vld [vmem:[%s310 + $0x44] sm:$0xf]
        %v329 = vld [vmem:[%s310 + $0x48] sm:$0xf]
        %v330 = vld [vmem:[%s310 + $0x4c] sm:$0xf]
        %v331 = vld [vmem:[%s310 + $0x50] sm:$0xf]
        %v332 = vld [vmem:[%s310 + $0x54] sm:$0xf]
        %v333 = vld [vmem:[%s310 + $0x58] sm:$0xf]
        %v334 = vld [vmem:[%s310 + $0x5c] sm:$0xf]
        %v335 = vld [vmem:[%s310 + $0x60] sm:$0xf]
        %v336 = vld [vmem:[%s310 + $0x64] sm:$0xf]
        %v337 = vld [vmem:[%s310 + $0x68] sm:$0xf]
        %v338 = vld [vmem:[%s310 + $0x6c] sm:$0xf]
        %v339 = vld [vmem:[%s310 + $0x70] sm:$0xf]
        %v340 = vld [vmem:[%s310 + $0x74] sm:$0xf]
        %v357 = vunpack.c.l.b16 %v294
        %v358 = vunpack.c.h.b16 %v294
        %v359 = vunpack.c.l.b16 %v295
        %v360 = vunpack.c.h.b16 %v295
        %v361 = vunpack.c.l.b16 %v296
        %v362 = vunpack.c.h.b16 %v296
        %v363 = vunpack.c.l.b16 %v297
        %v364 = vunpack.c.h.b16 %v297
        %v365 = vunpack.c.l.b16 %v298
        %v366 = vunpack.c.h.b16 %v298
        %v367 = vunpack.c.l.b16 %v299
        %v368 = vunpack.c.h.b16 %v299
        %v369 = vunpack.c.l.b16 %v300
        %v370 = vunpack.c.h.b16 %v300
        %v371 = vunpack.c.l.b16 %v301
        %v372 = vunpack.c.h.b16 %v301
        %v373 = vunpack.c.l.b16 %v302
        %v374 = vunpack.c.h.b16 %v302
        %v375 = vunpack.c.l.b16 %v303
        %v376 = vunpack.c.h.b16 %v303
        %v377 = vunpack.c.l.b16 %v304
        %v378 = vunpack.c.h.b16 %v304
        %v379 = vunpack.c.l.b16 %v305
        %v380 = vunpack.c.h.b16 %v305
        %v381 = vunpack.c.l.b16 %v306
        %v382 = vunpack.c.h.b16 %v306
        %v383 = vunpack.c.l.b16 %v307
        %v384 = vunpack.c.h.b16 %v307
        %v385 = vunpack.c.l.b16 %v308
        %v386 = vunpack.c.h.b16 %v308
        %v387 = vunpack.c.l.b16 %v309
        %v388 = vunpack.c.h.b16 %v309
        %v389 = vpack.c.b16 %v359, %v357
        %v390 = vpack.c.b16 %v360, %v358
        %v391 = vpack.c.b16 %v363, %v361
        %v392 = vpack.c.b16 %v364, %v362
        %v393 = vpack.c.b16 %v367, %v365
        %v394 = vpack.c.b16 %v368, %v366
        %v395 = vpack.c.b16 %v371, %v369
        %v396 = vpack.c.b16 %v372, %v370
        %v397 = vpack.c.b16 %v375, %v373
        %v398 = vpack.c.b16 %v376, %v374
        %v399 = vpack.c.b16 %v379, %v377
        %v400 = vpack.c.b16 %v380, %v378
        %v401 = vpack.c.b16 %v383, %v381
        %v402 = vpack.c.b16 %v384, %v382
        %v403 = vpack.c.b16 %v387, %v385
        %v404 = vpack.c.b16 %v388, %v386
        %v443 = vunpack.c.l.b16 %v311
        %v444 = vunpack.c.l.b16 %v312
        %v445 = vunpack.c.l.b16 %v313
        %v446 = vunpack.c.l.b16 %v314
        %v447 = vunpack.c.l.b16 %v315
        %v448 = vunpack.c.l.b16 %v316
        %v449 = vunpack.c.l.b16 %v317
        %v450 = vunpack.c.l.b16 %v318
        %v451 = vunpack.c.l.b16 %v319
        %v452 = vunpack.c.l.b16 %v320
        %v453 = vunpack.c.l.b16 %v321
        %v454 = vunpack.c.l.b16 %v322
        %v455 = vunpack.c.l.b16 %v323
        %v456 = vunpack.c.l.b16 %v324
        %v457 = vunpack.c.l.b16 %v325
        %v458 = vunpack.c.l.b16 %v326
        %v459 = vunpack.c.l.b16 %v327
        %v460 = vunpack.c.l.b16 %v328
        %v461 = vunpack.c.l.b16 %v329
        %v462 = vunpack.c.l.b16 %v330
        %v463 = vunpack.c.l.b16 %v331
        %v464 = vunpack.c.l.b16 %v332
        %v465 = vunpack.c.l.b16 %v333
        %v466 = vunpack.c.l.b16 %v334
        %v467 = vunpack.c.l.b16 %v335
        %v468 = vunpack.c.l.b16 %v336
        %v469 = vunpack.c.l.b16 %v337
        %v470 = vunpack.c.l.b16 %v338
        %v471 = vunpack.c.l.b16 %v339
        %v472 = vunpack.c.l.b16 %v340
        %v473 = vpack.c.b16 %v444, %v443
        %v474 = vpack.c.b16 %v446, %v445
        %v475 = vpack.c.b16 %v448, %v447
        %v476 = vpack.c.b16 %v450, %v449
        %v477 = vpack.c.b16 %v452, %v451
        %v478 = vpack.c.b16 %v454, %v453
        %v479 = vpack.c.b16 %v456, %v455
        %v480 = vpack.c.b16 %v458, %v457
        %v481 = vpack.c.b16 %v460, %v459
        %v482 = vpack.c.b16 %v462, %v461
        %v483 = vpack.c.b16 %v464, %v463
        %v484 = vpack.c.b16 %v466, %v465
        %v485 = vpack.c.b16 %v468, %v467
        %v486 = vpack.c.b16 %v470, %v469
        %v487 = vpack.c.b16 %v472, %v471
        %vm503 = vcmask 916480
        %v505 = vsel %vm503, %v390, 0
        %v508 = vsel %vm503, %v392, 0
        %v511 = vsel %vm503, %v394, 0
        %v514 = vsel %vm503, %v396, 0
        %v517 = vsel %vm503, %v398, 0
        %v520 = vsel %vm503, %v400, 0
        %v523 = vsel %vm503, %v402, 0
        %v526 = vsel %vm503, %v404, 0
        %528 = vmatprep.subr.bf16.mxu0 0
        %529 = vmatpush1.bf16.msra.mxu0 %v480
        %530 = vmatprep.subr.bf16.mxu0 0
        %531 = vmatpush1.bf16.msra.mxu0 %v479
        %532 = vmatprep.subr.bf16.mxu0 0
        %533 = vmatpush1.bf16.msra.mxu0 %v478
        %534 = vmatprep.subr.bf16.mxu0 0
        %535 = vmatpush1.bf16.msra.mxu0 %v477
        %536 = vmatprep.subr.bf16.mxu0 0
        %537 = vmatpush1.bf16.msra.mxu0 %v476
        %538 = vmatprep.subr.bf16.mxu0 0
        %539 = vmatpush1.bf16.msra.mxu0 %v475
        %540 = vmatprep.subr.bf16.mxu0 0
        %541 = vmatpush1.bf16.msra.mxu0 %v474
        %542 = vmatprep.subr.bf16.mxu0 0
        %543 = vmatpush1.bf16.msra.mxu0 %v473
        %544 = vmatprep.subr.bf16.mxu0 0
        %545 = vmatpush2.bf16.msra.mxu0 0
        %546 = vmatprep.subr.bf16.mxu0 0
        %547 = vmatpush2.bf16.msra.mxu0 %v487
        %548 = vmatprep.subr.bf16.mxu0 0
        %549 = vmatpush2.bf16.msra.mxu0 %v486
        %550 = vmatprep.subr.bf16.mxu0 0
        %551 = vmatpush2.bf16.msra.mxu0 %v485
        %552 = vmatprep.subr.bf16.mxu0 0
        %553 = vmatpush2.bf16.msra.mxu0 %v484
        %554 = vmatprep.subr.bf16.mxu0 0
        %555 = vmatpush2.bf16.msra.mxu0 %v483
        %556 = vmatprep.subr.bf16.mxu0 0
        %557 = vmatpush2.bf16.msra.mxu0 %v482
        %558 = vmatprep.subr.bf16.mxu0 0
        %559 = vmatpush2.bf16.msra.mxu0 %v481
        %560 = vmatprep.mubr.bf16.mxu0 %v505
        %561 = vmatmul.mubr.bf16.gmra.mxu0 %v389
        %v562 = vpop.f32.mrf.mxu0
        %v563 = vadd.f32 0.0, %v562
        %v564 = vpop.f32.mrf.mxu0
        %v565 = vpop.f32.mrf.mxu0
        %v566 = vadd.f32 0.0, %v565
        %v567 = vpop.f32.mrf.mxu0
        %568 = vmatprep.mubr.bf16.mxu0 %v508
        %569 = vmatmul.mubr.bf16.gmra.mxu0 %v391
        %v570 = vpop.f32.mrf.mxu0
        %v571 = vadd.f32 0.0, %v570
        %v572 = vpop.f32.mrf.mxu0
        %v573 = vpop.f32.mrf.mxu0
        %v574 = vadd.f32 0.0, %v573
        %v575 = vpop.f32.mrf.mxu0
        %576 = vmatprep.mubr.bf16.mxu0 %v511
        %577 = vmatmul.mubr.bf16.gmra.mxu0 %v393
        %v578 = vpop.f32.mrf.mxu0
        %v579 = vadd.f32 0.0, %v578
        %v580 = vpop.f32.mrf.mxu0
        %v581 = vpop.f32.mrf.mxu0
        %v582 = vadd.f32 0.0, %v581
        %v583 = vpop.f32.mrf.mxu0
        %584 = vmatprep.mubr.bf16.mxu0 %v514
        %585 = vmatmul.mubr.bf16.gmra.mxu0 %v395
        %v586 = vpop.f32.mrf.mxu0
        %v587 = vadd.f32 0.0, %v586
        %v588 = vpop.f32.mrf.mxu0
        %v589 = vpop.f32.mrf.mxu0
        %v590 = vadd.f32 0.0, %v589
        %v591 = vpop.f32.mrf.mxu0
        %592 = vmatprep.mubr.bf16.mxu0 %v517
        %593 = vmatmul.mubr.bf16.gmra.mxu0 %v397
        %v594 = vpop.f32.mrf.mxu0
        %v595 = vadd.f32 0.0, %v594
        %v596 = vpop.f32.mrf.mxu0
        %v597 = vpop.f32.mrf.mxu0
        %v598 = vadd.f32 0.0, %v597
        %v599 = vpop.f32.mrf.mxu0
        %600 = vmatprep.mubr.bf16.mxu0 %v520
        %601 = vmatmul.mubr.bf16.gmra.mxu0 %v399
        %v602 = vpop.f32.mrf.mxu0
        %v603 = vadd.f32 0.0, %v602
        %v604 = vpop.f32.mrf.mxu0
        %v605 = vpop.f32.mrf.mxu0
        %v606 = vadd.f32 0.0, %v605
        %v607 = vpop.f32.mrf.mxu0
        %608 = vmatprep.mubr.bf16.mxu0 %v523
        %609 = vmatmul.mubr.bf16.gmra.mxu0 %v401
        %v610 = vpop.f32.mrf.mxu0
        %v611 = vadd.f32 0.0, %v610
        %v612 = vpop.f32.mrf.mxu0
        %v613 = vpop.f32.mrf.mxu0
        %v614 = vadd.f32 0.0, %v613
        %v615 = vpop.f32.mrf.mxu0
        %616 = vmatprep.mubr.bf16.mxu0 %v526
        %617 = vmatmul.mubr.bf16.gmra.mxu0 %v403
        %v618 = vpop.f32.mrf.mxu0
        %v619 = vadd.f32 0.0, %v618
        %v620 = vpop.f32.mrf.mxu0
        %v621 = vpop.f32.mrf.mxu0
        %v622 = vadd.f32 0.0, %v621
        %v623 = vpop.f32.mrf.mxu0
        %624 = vdwg.mxu0
        %v641 = vunpack.c.l.b16 %v247
        %v642 = vunpack.c.h.b16 %v247
        %v643 = vunpack.c.l.b16 %v248
        %v644 = vunpack.c.h.b16 %v248
        %v645 = vunpack.c.l.b16 %v249
        %v646 = vunpack.c.h.b16 %v249
        %v647 = vunpack.c.l.b16 %v250
        %v648 = vunpack.c.h.b16 %v250
        %v649 = vunpack.c.l.b16 %v251
        %v650 = vunpack.c.h.b16 %v251
        %v651 = vunpack.c.l.b16 %v252
        %v652 = vunpack.c.h.b16 %v252
        %v653 = vunpack.c.l.b16 %v253
        %v654 = vunpack.c.h.b16 %v253
        %v655 = vunpack.c.l.b16 %v254
        %v656 = vunpack.c.h.b16 %v254
        %v657 = vunpack.c.l.b16 %v255
        %v658 = vunpack.c.h.b16 %v255
        %v659 = vunpack.c.l.b16 %v256
        %v660 = vunpack.c.h.b16 %v256
        %v661 = vunpack.c.l.b16 %v257
        %v662 = vunpack.c.h.b16 %v257
        %v663 = vunpack.c.l.b16 %v258
        %v664 = vunpack.c.h.b16 %v258
        %v665 = vunpack.c.l.b16 %v259
        %v666 = vunpack.c.h.b16 %v259
        %v667 = vunpack.c.l.b16 %v260
        %v668 = vunpack.c.h.b16 %v260
        %v669 = vunpack.c.l.b16 %v261
        %v670 = vunpack.c.h.b16 %v261
        %v671 = vunpack.c.l.b16 %v262
        %v672 = vunpack.c.h.b16 %v262
        %v673 = vpack.c.b16 %v643, %v641
        %v674 = vpack.c.b16 %v644, %v642
        %v675 = vpack.c.b16 %v647, %v645
        %v676 = vpack.c.b16 %v648, %v646
        %v677 = vpack.c.b16 %v651, %v649
        %v678 = vpack.c.b16 %v652, %v650
        %v679 = vpack.c.b16 %v655, %v653
        %v680 = vpack.c.b16 %v656, %v654
        %v681 = vpack.c.b16 %v659, %v657
        %v682 = vpack.c.b16 %v660, %v658
        %v683 = vpack.c.b16 %v663, %v661
        %v684 = vpack.c.b16 %v664, %v662
        %v685 = vpack.c.b16 %v667, %v665
        %v686 = vpack.c.b16 %v668, %v666
        %v687 = vpack.c.b16 %v671, %v669
        %v688 = vpack.c.b16 %v672, %v670
        %v727 = vunpack.c.l.b16 %v263
        %v728 = vunpack.c.l.b16 %v264
        %v729 = vunpack.c.l.b16 %v265
        %v730 = vunpack.c.l.b16 %v266
        %v731 = vunpack.c.l.b16 %v267
        %v732 = vunpack.c.l.b16 %v268
        %v733 = vunpack.c.l.b16 %v269
        %v734 = vunpack.c.l.b16 %v270
        %v735 = vunpack.c.l.b16 %v271
        %v736 = vunpack.c.l.b16 %v272
        %v737 = vunpack.c.l.b16 %v273
        %v738 = vunpack.c.l.b16 %v274
        %v739 = vunpack.c.l.b16 %v275
        %v740 = vunpack.c.l.b16 %v276
        %v741 = vunpack.c.l.b16 %v277
        %v742 = vunpack.c.l.b16 %v278
        %v743 = vunpack.c.l.b16 %v279
        %v744 = vunpack.c.l.b16 %v280
        %v745 = vunpack.c.l.b16 %v281
        %v746 = vunpack.c.l.b16 %v282
        %v747 = vunpack.c.l.b16 %v283
        %v748 = vunpack.c.l.b16 %v284
        %v749 = vunpack.c.l.b16 %v285
        %v750 = vunpack.c.l.b16 %v286
        %v751 = vunpack.c.l.b16 %v287
        %v752 = vunpack.c.l.b16 %v288
        %v753 = vunpack.c.l.b16 %v289
        %v754 = vunpack.c.l.b16 %v290
        %v755 = vunpack.c.l.b16 %v291
        %v756 = vunpack.c.l.b16 %v292
        %v757 = vpack.c.b16 %v728, %v727
        %v758 = vpack.c.b16 %v730, %v729
        %v759 = vpack.c.b16 %v732, %v731
        %v760 = vpack.c.b16 %v734, %v733
        %v761 = vpack.c.b16 %v736, %v735
        %v762 = vpack.c.b16 %v738, %v737
        %v763 = vpack.c.b16 %v740, %v739
        %v764 = vpack.c.b16 %v742, %v741
        %v765 = vpack.c.b16 %v744, %v743
        %v766 = vpack.c.b16 %v746, %v745
        %v767 = vpack.c.b16 %v748, %v747
        %v768 = vpack.c.b16 %v750, %v749
        %v769 = vpack.c.b16 %v752, %v751
        %v770 = vpack.c.b16 %v754, %v753
        %v771 = vpack.c.b16 %v756, %v755
        %v788 = vsel %vm503, %v674, 0
        %v791 = vsel %vm503, %v676, 0
        %v794 = vsel %vm503, %v678, 0
        %v797 = vsel %vm503, %v680, 0
        %v800 = vsel %vm503, %v682, 0
        %v803 = vsel %vm503, %v684, 0
        %v806 = vsel %vm503, %v686, 0
        %v809 = vsel %vm503, %v688, 0
        %811 = vmatprep.subr.bf16.mxu0 0
        %812 = vmatpush1.bf16.msra.mxu0 %v764
        %813 = vmatprep.subr.bf16.mxu0 0
        %814 = vmatpush1.bf16.msra.mxu0 %v763
        %815 = vmatprep.subr.bf16.mxu0 0
        %816 = vmatpush1.bf16.msra.mxu0 %v762
        %817 = vmatprep.subr.bf16.mxu0 0
        %818 = vmatpush1.bf16.msra.mxu0 %v761
        %819 = vmatprep.subr.bf16.mxu0 0
        %820 = vmatpush1.bf16.msra.mxu0 %v760
        %821 = vmatprep.subr.bf16.mxu0 0
        %822 = vmatpush1.bf16.msra.mxu0 %v759
        %823 = vmatprep.subr.bf16.mxu0 0
        %824 = vmatpush1.bf16.msra.mxu0 %v758
        %825 = vmatprep.subr.bf16.mxu0 0
        %826 = vmatpush1.bf16.msra.mxu0 %v757
        %827 = vmatprep.subr.bf16.mxu0 0
        %828 = vmatpush2.bf16.msra.mxu0 0
        %829 = vmatprep.subr.bf16.mxu0 0
        %830 = vmatpush2.bf16.msra.mxu0 %v771
        %831 = vmatprep.subr.bf16.mxu0 0
        %832 = vmatpush2.bf16.msra.mxu0 %v770
        %833 = vmatprep.subr.bf16.mxu0 0
        %834 = vmatpush2.bf16.msra.mxu0 %v769
        %835 = vmatprep.subr.bf16.mxu0 0
        %836 = vmatpush2.bf16.msra.mxu0 %v768
        %837 = vmatprep.subr.bf16.mxu0 0
        %838 = vmatpush2.bf16.msra.mxu0 %v767
        %839 = vmatprep.subr.bf16.mxu0 0
        %840 = vmatpush2.bf16.msra.mxu0 %v766
        %841 = vmatprep.subr.bf16.mxu0 0
        %842 = vmatpush2.bf16.msra.mxu0 %v765
        %843 = vmatprep.mubr.bf16.mxu0 %v788
        %844 = vmatmul.mubr.bf16.gmra.mxu0 %v673
        %v845 = vpop.f32.mrf.mxu0
        %v846 = vadd.f32 %v563, %v845
        %v847 = vpop.f32.mrf.mxu0
        %v848 = vpop.f32.mrf.mxu0
        %v849 = vadd.f32 %v566, %v848
        %v850 = vpop.f32.mrf.mxu0
        %851 = vmatprep.mubr.bf16.mxu0 %v791
        %852 = vmatmul.mubr.bf16.gmra.mxu0 %v675
        %v853 = vpop.f32.mrf.mxu0
        %v854 = vadd.f32 %v571, %v853
        %v855 = vpop.f32.mrf.mxu0
        %v856 = vpop.f32.mrf.mxu0
        %v857 = vadd.f32 %v574, %v856
        %v858 = vpop.f32.mrf.mxu0
        %859 = vmatprep.mubr.bf16.mxu0 %v794
        %860 = vmatmul.mubr.bf16.gmra.mxu0 %v677
        %v861 = vpop.f32.mrf.mxu0
        %v862 = vadd.f32 %v579, %v861
        %v863 = vpop.f32.mrf.mxu0
        %v864 = vpop.f32.mrf.mxu0
        %v865 = vadd.f32 %v582, %v864
        %v866 = vpop.f32.mrf.mxu0
        %867 = vmatprep.mubr.bf16.mxu0 %v797
        %868 = vmatmul.mubr.bf16.gmra.mxu0 %v679
        %v869 = vpop.f32.mrf.mxu0
        %v870 = vadd.f32 %v587, %v869
        %v871 = vpop.f32.mrf.mxu0
        %v872 = vpop.f32.mrf.mxu0
        %v873 = vadd.f32 %v590, %v872
        %v874 = vpop.f32.mrf.mxu0
        %875 = vmatprep.mubr.bf16.mxu0 %v800
        %876 = vmatmul.mubr.bf16.gmra.mxu0 %v681
        %v877 = vpop.f32.mrf.mxu0
        %v878 = vadd.f32 %v595, %v877
        %v879 = vpop.f32.mrf.mxu0
        %v880 = vpop.f32.mrf.mxu0
        %v881 = vadd.f32 %v598, %v880
        %v882 = vpop.f32.mrf.mxu0
        %883 = vmatprep.mubr.bf16.mxu0 %v803
        %884 = vmatmul.mubr.bf16.gmra.mxu0 %v683
        %v885 = vpop.f32.mrf.mxu0
        %v886 = vadd.f32 %v603, %v885
        %v887 = vpop.f32.mrf.mxu0
        %v888 = vpop.f32.mrf.mxu0
        %v889 = vadd.f32 %v606, %v888
        %v890 = vpop.f32.mrf.mxu0
        %891 = vmatprep.mubr.bf16.mxu0 %v806
        %892 = vmatmul.mubr.bf16.gmra.mxu0 %v685
        %v893 = vpop.f32.mrf.mxu0
        %v894 = vadd.f32 %v611, %v893
        %v895 = vpop.f32.mrf.mxu0
        %v896 = vpop.f32.mrf.mxu0
        %v897 = vadd.f32 %v614, %v896
        %v898 = vpop.f32.mrf.mxu0
        %899 = vmatprep.mubr.bf16.mxu0 %v809
        %900 = vmatmul.mubr.bf16.gmra.mxu0 %v687
        %v901 = vpop.f32.mrf.mxu0
        %v902 = vadd.f32 %v619, %v901
        %v903 = vpop.f32.mrf.mxu0
        %v904 = vpop.f32.mrf.mxu0
        %v905 = vadd.f32 %v622, %v904
        %v906 = vpop.f32.mrf.mxu0
        %907 = vdwg.mxu0
        %s908 = scalar_lea.vmem %s202, 16 [#allocation2]
        %v909 = vld [vmem:[%s908] sm:$0xff]
        %v910 = vld [vmem:[%s908 + $0x8] sm:$0xff]
        %v911 = vld [vmem:[%s908 + $0x10] sm:$0xff]
        %v912 = vld [vmem:[%s908 + $0x18] sm:$0xff]
        %v913 = vld [vmem:[%s908 + $0x20] sm:$0xff]
        %v914 = vld [vmem:[%s908 + $0x28] sm:$0xff]
        %v915 = vld [vmem:[%s908 + $0x30] sm:$0xff]
        %v916 = vld [vmem:[%s908 + $0x38] sm:$0xff]
        %v917 = vld [vmem:[%s908 + $0x60] sm:$0xff]
        %v918 = vld [vmem:[%s908 + $0x68] sm:$0xff]
        %v919 = vld [vmem:[%s908 + $0x70] sm:$0xff]
        %v920 = vld [vmem:[%s908 + $0x78] sm:$0xff]
        %v921 = vld [vmem:[%s908 + $0x80] sm:$0xff]
        %v922 = vld [vmem:[%s908 + $0x88] sm:$0xff]
        %v923 = vld [vmem:[%s908 + $0x90] sm:$0xff]
        %v924 = vld [vmem:[%s908 + $0x98] sm:$0xff]
        %s925 = scalar_lea.vmem [#allocation5], 240
        %v926 = vld [vmem:[%s925] sm:$0xf]
        %v927 = vld [vmem:[%s925 + $0x4] sm:$0xf]
        %v928 = vld [vmem:[%s925 + $0x8] sm:$0xf]
        %v929 = vld [vmem:[%s925 + $0xc] sm:$0xf]
        %v930 = vld [vmem:[%s925 + $0x10] sm:$0xf]
        %v931 = vld [vmem:[%s925 + $0x14] sm:$0xf]
        %v932 = vld [vmem:[%s925 + $0x18] sm:$0xf]
        %v933 = vld [vmem:[%s925 + $0x1c] sm:$0xf]
        %v934 = vld [vmem:[%s925 + $0x20] sm:$0xf]
        %v935 = vld [vmem:[%s925 + $0x24] sm:$0xf]
        %v936 = vld [vmem:[%s925 + $0x28] sm:$0xf]
        %v937 = vld [vmem:[%s925 + $0x2c] sm:$0xf]
        %v938 = vld [vmem:[%s925 + $0x30] sm:$0xf]
        %v939 = vld [vmem:[%s925 + $0x34] sm:$0xf]
        %v940 = vld [vmem:[%s925 + $0x38] sm:$0xf]
        %v941 = vld [vmem:[%s925 + $0x3c] sm:$0xf]
        %v942 = vld [vmem:[%s925 + $0x40] sm:$0xf]
        %v943 = vld [vmem:[%s925 + $0x44] sm:$0xf]
        %v944 = vld [vmem:[%s925 + $0x48] sm:$0xf]
        %v945 = vld [vmem:[%s925 + $0x4c] sm:$0xf]
        %v946 = vld [vmem:[%s925 + $0x50] sm:$0xf]
        %v947 = vld [vmem:[%s925 + $0x54] sm:$0xf]
        %v948 = vld [vmem:[%s925 + $0x58] sm:$0xf]
        %v949 = vld [vmem:[%s925 + $0x5c] sm:$0xf]
        %v950 = vld [vmem:[%s925 + $0x60] sm:$0xf]
        %v951 = vld [vmem:[%s925 + $0x64] sm:$0xf]
        %v952 = vld [vmem:[%s925 + $0x68] sm:$0xf]
        %v953 = vld [vmem:[%s925 + $0x6c] sm:$0xf]
        %v954 = vld [vmem:[%s925 + $0x70] sm:$0xf]
        %v955 = vld [vmem:[%s925 + $0x74] sm:$0xf]
        %v972 = vunpack.c.l.b16 %v909
        %v973 = vunpack.c.h.b16 %v909
        %v974 = vunpack.c.l.b16 %v910
        %v975 = vunpack.c.h.b16 %v910
        %v976 = vunpack.c.l.b16 %v911
        %v977 = vunpack.c.h.b16 %v911
        %v978 = vunpack.c.l.b16 %v912
        %v979 = vunpack.c.h.b16 %v912
        %v980 = vunpack.c.l.b16 %v913
        %v981 = vunpack.c.h.b16 %v913
        %v982 = vunpack.c.l.b16 %v914
        %v983 = vunpack.c.h.b16 %v914
        %v984 = vunpack.c.l.b16 %v915
        %v985 = vunpack.c.h.b16 %v915
        %v986 = vunpack.c.l.b16 %v916
        %v987 = vunpack.c.h.b16 %v916
        %v988 = vunpack.c.l.b16 %v917
        %v989 = vunpack.c.h.b16 %v917
        %v990 = vunpack.c.l.b16 %v918
        %v991 = vunpack.c.h.b16 %v918
        %v992 = vunpack.c.l.b16 %v919
        %v993 = vunpack.c.h.b16 %v919
        %v994 = vunpack.c.l.b16 %v920
        %v995 = vunpack.c.h.b16 %v920
        %v996 = vunpack.c.l.b16 %v921
        %v997 = vunpack.c.h.b16 %v921
        %v998 = vunpack.c.l.b16 %v922
        %v999 = vunpack.c.h.b16 %v922
        %v1000 = vunpack.c.l.b16 %v923
        %v1001 = vunpack.c.h.b16 %v923
        %v1002 = vunpack.c.l.b16 %v924
        %v1003 = vunpack.c.h.b16 %v924
        %v1004 = vpack.c.b16 %v974, %v972
        %v1005 = vpack.c.b16 %v975, %v973
        %v1006 = vpack.c.b16 %v978, %v976
        %v1007 = vpack.c.b16 %v979, %v977
        %v1008 = vpack.c.b16 %v982, %v980
        %v1009 = vpack.c.b16 %v983, %v981
        %v1010 = vpack.c.b16 %v986, %v984
        %v1011 = vpack.c.b16 %v987, %v985
        %v1012 = vpack.c.b16 %v990, %v988
        %v1013 = vpack.c.b16 %v991, %v989
        %v1014 = vpack.c.b16 %v994, %v992
        %v1015 = vpack.c.b16 %v995, %v993
        %v1016 = vpack.c.b16 %v998, %v996
        %v1017 = vpack.c.b16 %v999, %v997
        %v1018 = vpack.c.b16 %v1002, %v1000
        %v1019 = vpack.c.b16 %v1003, %v1001
        %v1058 = vunpack.c.l.b16 %v926
        %v1059 = vunpack.c.l.b16 %v927
        %v1060 = vunpack.c.l.b16 %v928
        %v1061 = vunpack.c.l.b16 %v929
        %v1062 = vunpack.c.l.b16 %v930
        %v1063 = vunpack.c.l.b16 %v931
        %v1064 = vunpack.c.l.b16 %v932
        %v1065 = vunpack.c.l.b16 %v933
        %v1066 = vunpack.c.l.b16 %v934
        %v1067 = vunpack.c.l.b16 %v935
        %v1068 = vunpack.c.l.b16 %v936
        %v1069 = vunpack.c.l.b16 %v937
        %v1070 = vunpack.c.l.b16 %v938
        %v1071 = vunpack.c.l.b16 %v939
        %v1072 = vunpack.c.l.b16 %v940
        %v1073 = vunpack.c.l.b16 %v941
        %v1074 = vunpack.c.l.b16 %v942
        %v1075 = vunpack.c.l.b16 %v943
        %v1076 = vunpack.c.l.b16 %v944
        %v1077 = vunpack.c.l.b16 %v945
        %v1078 = vunpack.c.l.b16 %v946
        %v1079 = vunpack.c.l.b16 %v947
        %v1080 = vunpack.c.l.b16 %v948
        %v1081 = vunpack.c.l.b16 %v949
        %v1082 = vunpack.c.l.b16 %v950
        %v1083 = vunpack.c.l.b16 %v951
        %v1084 = vunpack.c.l.b16 %v952
        %v1085 = vunpack.c.l.b16 %v953
        %v1086 = vunpack.c.l.b16 %v954
        %v1087 = vunpack.c.l.b16 %v955
        %v1088 = vpack.c.b16 %v1059, %v1058
        %v1089 = vpack.c.b16 %v1061, %v1060
        %v1090 = vpack.c.b16 %v1063, %v1062
        %v1091 = vpack.c.b16 %v1065, %v1064
        %v1092 = vpack.c.b16 %v1067, %v1066
        %v1093 = vpack.c.b16 %v1069, %v1068
        %v1094 = vpack.c.b16 %v1071, %v1070
        %v1095 = vpack.c.b16 %v1073, %v1072
        %v1096 = vpack.c.b16 %v1075, %v1074
        %v1097 = vpack.c.b16 %v1077, %v1076
        %v1098 = vpack.c.b16 %v1079, %v1078
        %v1099 = vpack.c.b16 %v1081, %v1080
        %v1100 = vpack.c.b16 %v1083, %v1082
        %v1101 = vpack.c.b16 %v1085, %v1084
        %v1102 = vpack.c.b16 %v1087, %v1086
        %v1119 = vsel %vm503, %v1005, 0
        %v1122 = vsel %vm503, %v1007, 0
        %v1125 = vsel %vm503, %v1009, 0
        %v1128 = vsel %vm503, %v1011, 0
        %v1131 = vsel %vm503, %v1013, 0
        %v1134 = vsel %vm503, %v1015, 0
        %v1137 = vsel %vm503, %v1017, 0
        %v1140 = vsel %vm503, %v1019, 0
        %1142 = vmatprep.subr.bf16.mxu0 0
        %1143 = vmatpush1.bf16.msra.mxu0 %v1095
        %1144 = vmatprep.subr.bf16.mxu0 0
        %1145 = vmatpush1.bf16.msra.mxu0 %v1094
        %1146 = vmatprep.subr.bf16.mxu0 0
        %1147 = vmatpush1.bf16.msra.mxu0 %v1093
        %1148 = vmatprep.subr.bf16.mxu0 0
        %1149 = vmatpush1.bf16.msra.mxu0 %v1092
        %1150 = vmatprep.subr.bf16.mxu0 0
        %1151 = vmatpush1.bf16.msra.mxu0 %v1091
        %1152 = vmatprep.subr.bf16.mxu0 0
        %1153 = vmatpush1.bf16.msra.mxu0 %v1090
        %1154 = vmatprep.subr.bf16.mxu0 0
        %1155 = vmatpush1.bf16.msra.mxu0 %v1089
        %1156 = vmatprep.subr.bf16.mxu0 0
        %1157 = vmatpush1.bf16.msra.mxu0 %v1088
        %1158 = vmatprep.subr.bf16.mxu0 0
        %1159 = vmatpush2.bf16.msra.mxu0 0
        %1160 = vmatprep.subr.bf16.mxu0 0
        %1161 = vmatpush2.bf16.msra.mxu0 %v1102
        %1162 = vmatprep.subr.bf16.mxu0 0
        %1163 = vmatpush2.bf16.msra.mxu0 %v1101
        %1164 = vmatprep.subr.bf16.mxu0 0
        %1165 = vmatpush2.bf16.msra.mxu0 %v1100
        %1166 = vmatprep.subr.bf16.mxu0 0
        %1167 = vmatpush2.bf16.msra.mxu0 %v1099
        %1168 = vmatprep.subr.bf16.mxu0 0
        %1169 = vmatpush2.bf16.msra.mxu0 %v1098
        %1170 = vmatprep.subr.bf16.mxu0 0
        %1171 = vmatpush2.bf16.msra.mxu0 %v1097
        %1172 = vmatprep.subr.bf16.mxu0 0
        %1173 = vmatpush2.bf16.msra.mxu0 %v1096
        %1174 = vmatprep.mubr.bf16.mxu0 %v1119
        %1175 = vmatmul.mubr.bf16.gmra.mxu0 %v1004
        %v1176 = vpop.f32.mrf.mxu0
        %v1177 = vadd.f32 0.0, %v1176
        %v1178 = vpop.f32.mrf.mxu0
        %v1179 = vpop.f32.mrf.mxu0
        %v1180 = vadd.f32 0.0, %v1179
        %v1181 = vpop.f32.mrf.mxu0
        %1182 = vmatprep.mubr.bf16.mxu0 %v1122
        %1183 = vmatmul.mubr.bf16.gmra.mxu0 %v1006
        %v1184 = vpop.f32.mrf.mxu0
        %v1185 = vadd.f32 0.0, %v1184
        %v1186 = vpop.f32.mrf.mxu0
        %v1187 = vpop.f32.mrf.mxu0
        %v1188 = vadd.f32 0.0, %v1187
        %v1189 = vpop.f32.mrf.mxu0
        %1190 = vmatprep.mubr.bf16.mxu0 %v1125
        %1191 = vmatmul.mubr.bf16.gmra.mxu0 %v1008
        %v1192 = vpop.f32.mrf.mxu0
        %v1193 = vadd.f32 0.0, %v1192
        %v1194 = vpop.f32.mrf.mxu0
        %v1195 = vpop.f32.mrf.mxu0
        %v1196 = vadd.f32 0.0, %v1195
        %v1197 = vpop.f32.mrf.mxu0
        %1198 = vmatprep.mubr.bf16.mxu0 %v1128
        %1199 = vmatmul.mubr.bf16.gmra.mxu0 %v1010
        %v1200 = vpop.f32.mrf.mxu0
        %v1201 = vadd.f32 0.0, %v1200
        %v1202 = vpop.f32.mrf.mxu0
        %v1203 = vpop.f32.mrf.mxu0
        %v1204 = vadd.f32 0.0, %v1203
        %v1205 = vpop.f32.mrf.mxu0
        %1206 = vmatprep.mubr.bf16.mxu0 %v1131
        %1207 = vmatmul.mubr.bf16.gmra.mxu0 %v1012
        %v1208 = vpop.f32.mrf.mxu0
        %v1209 = vadd.f32 0.0, %v1208
        %v1210 = vpop.f32.mrf.mxu0
        %v1211 = vpop.f32.mrf.mxu0
        %v1212 = vadd.f32 0.0, %v1211
        %v1213 = vpop.f32.mrf.mxu0
        %1214 = vmatprep.mubr.bf16.mxu0 %v1134
        %1215 = vmatmul.mubr.bf16.gmra.mxu0 %v1014
        %v1216 = vpop.f32.mrf.mxu0
        %v1217 = vadd.f32 0.0, %v1216
        %v1218 = vpop.f32.mrf.mxu0
        %v1219 = vpop.f32.mrf.mxu0
        %v1220 = vadd.f32 0.0, %v1219
        %v1221 = vpop.f32.mrf.mxu0
        %1222 = vmatprep.mubr.bf16.mxu0 %v1137
        %1223 = vmatmul.mubr.bf16.gmra.mxu0 %v1016
        %v1224 = vpop.f32.mrf.mxu0
        %v1225 = vadd.f32 0.0, %v1224
        %v1226 = vpop.f32.mrf.mxu0
        %v1227 = vpop.f32.mrf.mxu0
        %v1228 = vadd.f32 0.0, %v1227
        %v1229 = vpop.f32.mrf.mxu0
        %1230 = vmatprep.mubr.bf16.mxu0 %v1140
        %1231 = vmatmul.mubr.bf16.gmra.mxu0 %v1018
        %v1232 = vpop.f32.mrf.mxu0
        %v1233 = vadd.f32 0.0, %v1232
        %v1234 = vpop.f32.mrf.mxu0
        %v1235 = vpop.f32.mrf.mxu0
        %v1236 = vadd.f32 0.0, %v1235
        %v1237 = vpop.f32.mrf.mxu0
        %1238 = vdwg.mxu0
        %v1239 = vadd.f32 %v846, %v1177
        %v1240 = vadd.f32 %v849, %v1180
        %v1241 = vadd.f32 %v854, %v1185
        %v1242 = vadd.f32 %v857, %v1188
        %v1243 = vadd.f32 %v862, %v1193
        %v1244 = vadd.f32 %v865, %v1196
        %v1245 = vadd.f32 %v870, %v1201
        %v1246 = vadd.f32 %v873, %v1204
        %v1247 = vadd.f32 %v878, %v1209
        %v1248 = vadd.f32 %v881, %v1212
        %v1249 = vadd.f32 %v886, %v1217
        %v1250 = vadd.f32 %v889, %v1220
        %v1251 = vadd.f32 %v894, %v1225
        %v1252 = vadd.f32 %v897, %v1228
        %v1253 = vadd.f32 %v902, %v1233
        %v1254 = vadd.f32 %v905, %v1236
        %s1255 = scalar_lea.vmem %s202, 24 [#allocation2]
        %v1256 = vld [vmem:[%s1255] sm:$0xff]
        %v1257 = vld [vmem:[%s1255 + $0x8] sm:$0xff]
        %v1258 = vld [vmem:[%s1255 + $0x10] sm:$0xff]
        %v1259 = vld [vmem:[%s1255 + $0x18] sm:$0xff]
        %v1260 = vld [vmem:[%s1255 + $0x20] sm:$0xff]
        %v1261 = vld [vmem:[%s1255 + $0x28] sm:$0xff]
        %v1262 = vld [vmem:[%s1255 + $0x30] sm:$0xff]
        %v1263 = vld [vmem:[%s1255 + $0x38] sm:$0xff]
        %v1264 = vld [vmem:[%s1255 + $0x60] sm:$0xff]
        %v1265 = vld [vmem:[%s1255 + $0x68] sm:$0xff]
        %v1266 = vld [vmem:[%s1255 + $0x70] sm:$0xff]
        %v1267 = vld [vmem:[%s1255 + $0x78] sm:$0xff]
        %v1268 = vld [vmem:[%s1255 + $0x80] sm:$0xff]
        %v1269 = vld [vmem:[%s1255 + $0x88] sm:$0xff]
        %v1270 = vld [vmem:[%s1255 + $0x90] sm:$0xff]
        %v1271 = vld [vmem:[%s1255 + $0x98] sm:$0xff]
        %s1272 = scalar_lea.vmem [#allocation5], 360
        %v1273 = vld [vmem:[%s1272] sm:$0xf]
        %v1274 = vld [vmem:[%s1272 + $0x4] sm:$0xf]
        %v1275 = vld [vmem:[%s1272 + $0x8] sm:$0xf]
        %v1276 = vld [vmem:[%s1272 + $0xc] sm:$0xf]
        %v1277 = vld [vmem:[%s1272 + $0x10] sm:$0xf]
        %v1278 = vld [vmem:[%s1272 + $0x14] sm:$0xf]
        %v1279 = vld [vmem:[%s1272 + $0x18] sm:$0xf]
        %v1280 = vld [vmem:[%s1272 + $0x1c] sm:$0xf]
        %v1281 = vld [vmem:[%s1272 + $0x20] sm:$0xf]
        %v1282 = vld [vmem:[%s1272 + $0x24] sm:$0xf]
        %v1283 = vld [vmem:[%s1272 + $0x28] sm:$0xf]
        %v1284 = vld [vmem:[%s1272 + $0x2c] sm:$0xf]
        %v1285 = vld [vmem:[%s1272 + $0x30] sm:$0xf]
        %v1286 = vld [vmem:[%s1272 + $0x34] sm:$0xf]
        %v1287 = vld [vmem:[%s1272 + $0x38] sm:$0xf]
        %v1288 = vld [vmem:[%s1272 + $0x3c] sm:$0xf]
        %v1289 = vld [vmem:[%s1272 + $0x40] sm:$0xf]
        %v1290 = vld [vmem:[%s1272 + $0x44] sm:$0xf]
        %v1291 = vld [vmem:[%s1272 + $0x48] sm:$0xf]
        %v1292 = vld [vmem:[%s1272 + $0x4c] sm:$0xf]
        %v1293 = vld [vmem:[%s1272 + $0x50] sm:$0xf]
        %v1294 = vld [vmem:[%s1272 + $0x54] sm:$0xf]
        %v1295 = vld [vmem:[%s1272 + $0x58] sm:$0xf]
        %v1296 = vld [vmem:[%s1272 + $0x5c] sm:$0xf]
        %v1297 = vld [vmem:[%s1272 + $0x60] sm:$0xf]
        %v1298 = vld [vmem:[%s1272 + $0x64] sm:$0xf]
        %v1299 = vld [vmem:[%s1272 + $0x68] sm:$0xf]
        %v1300 = vld [vmem:[%s1272 + $0x6c] sm:$0xf]
        %v1301 = vld [vmem:[%s1272 + $0x70] sm:$0xf]
        %v1302 = vld [vmem:[%s1272 + $0x74] sm:$0xf]
        %v1319 = vunpack.c.l.b16 %v1256
        %v1320 = vunpack.c.h.b16 %v1256
        %v1321 = vunpack.c.l.b16 %v1257
        %v1322 = vunpack.c.h.b16 %v1257
        %v1323 = vunpack.c.l.b16 %v1258
        %v1324 = vunpack.c.h.b16 %v1258
        %v1325 = vunpack.c.l.b16 %v1259
        %v1326 = vunpack.c.h.b16 %v1259
        %v1327 = vunpack.c.l.b16 %v1260
        %v1328 = vunpack.c.h.b16 %v1260
        %v1329 = vunpack.c.l.b16 %v1261
        %v1330 = vunpack.c.h.b16 %v1261
        %v1331 = vunpack.c.l.b16 %v1262
        %v1332 = vunpack.c.h.b16 %v1262
        %v1333 = vunpack.c.l.b16 %v1263
        %v1334 = vunpack.c.h.b16 %v1263
        %v1335 = vunpack.c.l.b16 %v1264
        %v1336 = vunpack.c.h.b16 %v1264
        %v1337 = vunpack.c.l.b16 %v1265
        %v1338 = vunpack.c.h.b16 %v1265
        %v1339 = vunpack.c.l.b16 %v1266
        %v1340 = vunpack.c.h.b16 %v1266
        %v1341 = vunpack.c.l.b16 %v1267
        %v1342 = vunpack.c.h.b16 %v1267
        %v1343 = vunpack.c.l.b16 %v1268
        %v1344 = vunpack.c.h.b16 %v1268
        %v1345 = vunpack.c.l.b16 %v1269
        %v1346 = vunpack.c.h.b16 %v1269
        %v1347 = vunpack.c.l.b16 %v1270
        %v1348 = vunpack.c.h.b16 %v1270
        %v1349 = vunpack.c.l.b16 %v1271
        %v1350 = vunpack.c.h.b16 %v1271
        %v1351 = vpack.c.b16 %v1321, %v1319
        %v1352 = vpack.c.b16 %v1322, %v1320
        %v1353 = vpack.c.b16 %v1325, %v1323
        %v1354 = vpack.c.b16 %v1326, %v1324
        %v1355 = vpack.c.b16 %v1329, %v1327
        %v1356 = vpack.c.b16 %v1330, %v1328
        %v1357 = vpack.c.b16 %v1333, %v1331
        %v1358 = vpack.c.b16 %v1334, %v1332
        %v1359 = vpack.c.b16 %v1337, %v1335
        %v1360 = vpack.c.b16 %v1338, %v1336
        %v1361 = vpack.c.b16 %v1341, %v1339
        %v1362 = vpack.c.b16 %v1342, %v1340
        %v1363 = vpack.c.b16 %v1345, %v1343
        %v1364 = vpack.c.b16 %v1346, %v1344
        %v1365 = vpack.c.b16 %v1349, %v1347
        %v1366 = vpack.c.b16 %v1350, %v1348
        %v1405 = vunpack.c.l.b16 %v1273
        %v1406 = vunpack.c.l.b16 %v1274
        %v1407 = vunpack.c.l.b16 %v1275
        %v1408 = vunpack.c.l.b16 %v1276
        %v1409 = vunpack.c.l.b16 %v1277
        %v1410 = vunpack.c.l.b16 %v1278
        %v1411 = vunpack.c.l.b16 %v1279
        %v1412 = vunpack.c.l.b16 %v1280
        %v1413 = vunpack.c.l.b16 %v1281
        %v1414 = vunpack.c.l.b16 %v1282
        %v1415 = vunpack.c.l.b16 %v1283
        %v1416 = vunpack.c.l.b16 %v1284
        %v1417 = vunpack.c.l.b16 %v1285
        %v1418 = vunpack.c.l.b16 %v1286
        %v1419 = vunpack.c.l.b16 %v1287
        %v1420 = vunpack.c.l.b16 %v1288
        %v1421 = vunpack.c.l.b16 %v1289
        %v1422 = vunpack.c.l.b16 %v1290
        %v1423 = vunpack.c.l.b16 %v1291
        %v1424 = vunpack.c.l.b16 %v1292
        %v1425 = vunpack.c.l.b16 %v1293
        %v1426 = vunpack.c.l.b16 %v1294
        %v1427 = vunpack.c.l.b16 %v1295
        %v1428 = vunpack.c.l.b16 %v1296
        %v1429 = vunpack.c.l.b16 %v1297
        %v1430 = vunpack.c.l.b16 %v1298
        %v1431 = vunpack.c.l.b16 %v1299
        %v1432 = vunpack.c.l.b16 %v1300
        %v1433 = vunpack.c.l.b16 %v1301
        %v1434 = vunpack.c.l.b16 %v1302
        %v1435 = vpack.c.b16 %v1406, %v1405
        %v1436 = vpack.c.b16 %v1408, %v1407
        %v1437 = vpack.c.b16 %v1410, %v1409
        %v1438 = vpack.c.b16 %v1412, %v1411
        %v1439 = vpack.c.b16 %v1414, %v1413
        %v1440 = vpack.c.b16 %v1416, %v1415
        %v1441 = vpack.c.b16 %v1418, %v1417
        %v1442 = vpack.c.b16 %v1420, %v1419
        %v1443 = vpack.c.b16 %v1422, %v1421
        %v1444 = vpack.c.b16 %v1424, %v1423
        %v1445 = vpack.c.b16 %v1426, %v1425
        %v1446 = vpack.c.b16 %v1428, %v1427
        %v1447 = vpack.c.b16 %v1430, %v1429
        %v1448 = vpack.c.b16 %v1432, %v1431
        %v1449 = vpack.c.b16 %v1434, %v1433
        %v1466 = vsel %vm503, %v1352, 0
        %v1469 = vsel %vm503, %v1354, 0
        %v1472 = vsel %vm503, %v1356, 0
        %v1475 = vsel %vm503, %v1358, 0
        %v1478 = vsel %vm503, %v1360, 0
        %v1481 = vsel %vm503, %v1362, 0
        %v1484 = vsel %vm503, %v1364, 0
        %v1487 = vsel %vm503, %v1366, 0
        %1489 = vmatprep.subr.bf16.mxu0 0
        %1490 = vmatpush1.bf16.msra.mxu0 %v1442
        %1491 = vmatprep.subr.bf16.mxu0 0
        %1492 = vmatpush1.bf16.msra.mxu0 %v1441
        %1493 = vmatprep.subr.bf16.mxu0 0
        %1494 = vmatpush1.bf16.msra.mxu0 %v1440
        %1495 = vmatprep.subr.bf16.mxu0 0
        %1496 = vmatpush1.bf16.msra.mxu0 %v1439
        %1497 = vmatprep.subr.bf16.mxu0 0
        %1498 = vmatpush1.bf16.msra.mxu0 %v1438
        %1499 = vmatprep.subr.bf16.mxu0 0
        %1500 = vmatpush1.bf16.msra.mxu0 %v1437
        %1501 = vmatprep.subr.bf16.mxu0 0
        %1502 = vmatpush1.bf16.msra.mxu0 %v1436
        %1503 = vmatprep.subr.bf16.mxu0 0
        %1504 = vmatpush1.bf16.msra.mxu0 %v1435
        %1505 = vmatprep.subr.bf16.mxu0 0
        %1506 = vmatpush2.bf16.msra.mxu0 0
        %1507 = vmatprep.subr.bf16.mxu0 0
        %1508 = vmatpush2.bf16.msra.mxu0 %v1449
        %1509 = vmatprep.subr.bf16.mxu0 0
        %1510 = vmatpush2.bf16.msra.mxu0 %v1448
        %1511 = vmatprep.subr.bf16.mxu0 0
        %1512 = vmatpush2.bf16.msra.mxu0 %v1447
        %1513 = vmatprep.subr.bf16.mxu0 0
        %1514 = vmatpush2.bf16.msra.mxu0 %v1446
        %1515 = vmatprep.subr.bf16.mxu0 0
        %1516 = vmatpush2.bf16.msra.mxu0 %v1445
        %1517 = vmatprep.subr.bf16.mxu0 0
        %1518 = vmatpush2.bf16.msra.mxu0 %v1444
        %1519 = vmatprep.subr.bf16.mxu0 0
        %1520 = vmatpush2.bf16.msra.mxu0 %v1443
        %1521 = vmatprep.mubr.bf16.mxu0 %v1466
        %1522 = vmatmul.mubr.bf16.gmra.mxu0 %v1351
        %v1523 = vpop.f32.mrf.mxu0
        %v1524 = vadd.f32 0.0, %v1523
        %v1525 = vpop.f32.mrf.mxu0
        %v1526 = vpop.f32.mrf.mxu0
        %v1527 = vadd.f32 0.0, %v1526
        %v1528 = vpop.f32.mrf.mxu0
        %1529 = vmatprep.mubr.bf16.mxu0 %v1469
        %1530 = vmatmul.mubr.bf16.gmra.mxu0 %v1353
        %v1531 = vpop.f32.mrf.mxu0
        %v1532 = vadd.f32 0.0, %v1531
        %v1533 = vpop.f32.mrf.mxu0
        %v1534 = vpop.f32.mrf.mxu0
        %v1535 = vadd.f32 0.0, %v1534
        %v1536 = vpop.f32.mrf.mxu0
        %1537 = vmatprep.mubr.bf16.mxu0 %v1472
        %1538 = vmatmul.mubr.bf16.gmra.mxu0 %v1355
        %v1539 = vpop.f32.mrf.mxu0
        %v1540 = vadd.f32 0.0, %v1539
        %v1541 = vpop.f32.mrf.mxu0
        %v1542 = vpop.f32.mrf.mxu0
        %v1543 = vadd.f32 0.0, %v1542
        %v1544 = vpop.f32.mrf.mxu0
        %1545 = vmatprep.mubr.bf16.mxu0 %v1475
        %1546 = vmatmul.mubr.bf16.gmra.mxu0 %v1357
        %v1547 = vpop.f32.mrf.mxu0
        %v1548 = vadd.f32 0.0, %v1547
        %v1549 = vpop.f32.mrf.mxu0
        %v1550 = vpop.f32.mrf.mxu0
        %v1551 = vadd.f32 0.0, %v1550
        %v1552 = vpop.f32.mrf.mxu0
        %1553 = vmatprep.mubr.bf16.mxu0 %v1478
        %1554 = vmatmul.mubr.bf16.gmra.mxu0 %v1359
        %v1555 = vpop.f32.mrf.mxu0
        %v1556 = vadd.f32 0.0, %v1555
        %v1557 = vpop.f32.mrf.mxu0
        %v1558 = vpop.f32.mrf.mxu0
        %v1559 = vadd.f32 0.0, %v1558
        %v1560 = vpop.f32.mrf.mxu0
        %1561 = vmatprep.mubr.bf16.mxu0 %v1481
        %1562 = vmatmul.mubr.bf16.gmra.mxu0 %v1361
        %v1563 = vpop.f32.mrf.mxu0
        %v1564 = vadd.f32 0.0, %v1563
        %v1565 = vpop.f32.mrf.mxu0
        %v1566 = vpop.f32.mrf.mxu0
        %v1567 = vadd.f32 0.0, %v1566
        %v1568 = vpop.f32.mrf.mxu0
        %1569 = vmatprep.mubr.bf16.mxu0 %v1484
        %1570 = vmatmul.mubr.bf16.gmra.mxu0 %v1363
        %v1571 = vpop.f32.mrf.mxu0
        %v1572 = vadd.f32 0.0, %v1571
        %v1573 = vpop.f32.mrf.mxu0
        %v1574 = vpop.f32.mrf.mxu0
        %v1575 = vadd.f32 0.0, %v1574
        %v1576 = vpop.f32.mrf.mxu0
        %1577 = vmatprep.mubr.bf16.mxu0 %v1487
        %1578 = vmatmul.mubr.bf16.gmra.mxu0 %v1365
        %v1579 = vpop.f32.mrf.mxu0
        %v1580 = vadd.f32 0.0, %v1579
        %v1581 = vpop.f32.mrf.mxu0
        %v1582 = vpop.f32.mrf.mxu0
        %v1583 = vadd.f32 0.0, %v1582
        %v1584 = vpop.f32.mrf.mxu0
        %1585 = vdwg.mxu0
        %v1586 = vadd.f32 %v1239, %v1524
        %v1587 = vadd.f32 %v1240, %v1527
        %v1588 = vadd.f32 %v1241, %v1532
        %v1589 = vadd.f32 %v1242, %v1535
        %v1590 = vadd.f32 %v1243, %v1540
        %v1591 = vadd.f32 %v1244, %v1543
        %v1592 = vadd.f32 %v1245, %v1548
        %v1593 = vadd.f32 %v1246, %v1551
        %v1594 = vadd.f32 %v1247, %v1556
        %v1595 = vadd.f32 %v1248, %v1559
        %v1596 = vadd.f32 %v1249, %v1564
        %v1597 = vadd.f32 %v1250, %v1567
        %v1598 = vadd.f32 %v1251, %v1572
        %v1599 = vadd.f32 %v1252, %v1575
        %v1600 = vadd.f32 %v1253, %v1580
        %v1601 = vadd.f32 %v1254, %v1583
        %s1602 = scalar_lea.vmem %s202, 32 [#allocation2]
        %v1603 = vld [vmem:[%s1602] sm:$0xff]
        %v1604 = vld [vmem:[%s1602 + $0x8] sm:$0xff]
        %v1605 = vld [vmem:[%s1602 + $0x10] sm:$0xff]
        %v1606 = vld [vmem:[%s1602 + $0x18] sm:$0xff]
        %v1607 = vld [vmem:[%s1602 + $0x20] sm:$0xff]
        %v1608 = vld [vmem:[%s1602 + $0x28] sm:$0xff]
        %v1609 = vld [vmem:[%s1602 + $0x30] sm:$0xff]
        %v1610 = vld [vmem:[%s1602 + $0x38] sm:$0xff]
        %v1611 = vld [vmem:[%s1602 + $0x60] sm:$0xff]
        %v1612 = vld [vmem:[%s1602 + $0x68] sm:$0xff]
        %v1613 = vld [vmem:[%s1602 + $0x70] sm:$0xff]
        %v1614 = vld [vmem:[%s1602 + $0x78] sm:$0xff]
        %v1615 = vld [vmem:[%s1602 + $0x80] sm:$0xff]
        %v1616 = vld [vmem:[%s1602 + $0x88] sm:$0xff]
        %v1617 = vld [vmem:[%s1602 + $0x90] sm:$0xff]
        %v1618 = vld [vmem:[%s1602 + $0x98] sm:$0xff]
        %s1619 = scalar_lea.vmem [#allocation5], 480
        %v1620 = vld [vmem:[%s1619] sm:$0xf]
        %v1621 = vld [vmem:[%s1619 + $0x4] sm:$0xf]
        %v1622 = vld [vmem:[%s1619 + $0x8] sm:$0xf]
        %v1623 = vld [vmem:[%s1619 + $0xc] sm:$0xf]
        %v1624 = vld [vmem:[%s1619 + $0x10] sm:$0xf]
        %v1625 = vld [vmem:[%s1619 + $0x14] sm:$0xf]
        %v1626 = vld [vmem:[%s1619 + $0x18] sm:$0xf]
        %v1627 = vld [vmem:[%s1619 + $0x1c] sm:$0xf]
        %v1628 = vld [vmem:[%s1619 + $0x20] sm:$0xf]
        %v1629 = vld [vmem:[%s1619 + $0x24] sm:$0xf]
        %v1630 = vld [vmem:[%s1619 + $0x28] sm:$0xf]
        %v1631 = vld [vmem:[%s1619 + $0x2c] sm:$0xf]
        %v1632 = vld [vmem:[%s1619 + $0x30] sm:$0xf]
        %v1633 = vld [vmem:[%s1619 + $0x34] sm:$0xf]
        %v1634 = vld [vmem:[%s1619 + $0x38] sm:$0xf]
        %v1635 = vld [vmem:[%s1619 + $0x3c] sm:$0xf]
        %v1636 = vld [vmem:[%s1619 + $0x40] sm:$0xf]
        %v1637 = vld [vmem:[%s1619 + $0x44] sm:$0xf]
        %v1638 = vld [vmem:[%s1619 + $0x48] sm:$0xf]
        %v1639 = vld [vmem:[%s1619 + $0x4c] sm:$0xf]
        %v1640 = vld [vmem:[%s1619 + $0x50] sm:$0xf]
        %v1641 = vld [vmem:[%s1619 + $0x54] sm:$0xf]
        %v1642 = vld [vmem:[%s1619 + $0x58] sm:$0xf]
        %v1643 = vld [vmem:[%s1619 + $0x5c] sm:$0xf]
        %v1644 = vld [vmem:[%s1619 + $0x60] sm:$0xf]
        %v1645 = vld [vmem:[%s1619 + $0x64] sm:$0xf]
        %v1646 = vld [vmem:[%s1619 + $0x68] sm:$0xf]
        %v1647 = vld [vmem:[%s1619 + $0x6c] sm:$0xf]
        %v1648 = vld [vmem:[%s1619 + $0x70] sm:$0xf]
        %v1649 = vld [vmem:[%s1619 + $0x74] sm:$0xf]
        %v1666 = vunpack.c.l.b16 %v1603
        %v1667 = vunpack.c.h.b16 %v1603
        %v1668 = vunpack.c.l.b16 %v1604
        %v1669 = vunpack.c.h.b16 %v1604
        %v1670 = vunpack.c.l.b16 %v1605
        %v1671 = vunpack.c.h.b16 %v1605
        %v1672 = vunpack.c.l.b16 %v1606
        %v1673 = vunpack.c.h.b16 %v1606
        %v1674 = vunpack.c.l.b16 %v1607
        %v1675 = vunpack.c.h.b16 %v1607
        %v1676 = vunpack.c.l.b16 %v1608
        %v1677 = vunpack.c.h.b16 %v1608
        %v1678 = vunpack.c.l.b16 %v1609
        %v1679 = vunpack.c.h.b16 %v1609
        %v1680 = vunpack.c.l.b16 %v1610
        %v1681 = vunpack.c.h.b16 %v1610
        %v1682 = vunpack.c.l.b16 %v1611
        %v1683 = vunpack.c.h.b16 %v1611
        %v1684 = vunpack.c.l.b16 %v1612
        %v1685 = vunpack.c.h.b16 %v1612
        %v1686 = vunpack.c.l.b16 %v1613
        %v1687 = vunpack.c.h.b16 %v1613
        %v1688 = vunpack.c.l.b16 %v1614
        %v1689 = vunpack.c.h.b16 %v1614
        %v1690 = vunpack.c.l.b16 %v1615
        %v1691 = vunpack.c.h.b16 %v1615
        %v1692 = vunpack.c.l.b16 %v1616
        %v1693 = vunpack.c.h.b16 %v1616
        %v1694 = vunpack.c.l.b16 %v1617
        %v1695 = vunpack.c.h.b16 %v1617
        %v1696 = vunpack.c.l.b16 %v1618
        %v1697 = vunpack.c.h.b16 %v1618
        %v1698 = vpack.c.b16 %v1668, %v1666
        %v1699 = vpack.c.b16 %v1669, %v1667
        %v1700 = vpack.c.b16 %v1672, %v1670
        %v1701 = vpack.c.b16 %v1673, %v1671
        %v1702 = vpack.c.b16 %v1676, %v1674
        %v1703 = vpack.c.b16 %v1677, %v1675
        %v1704 = vpack.c.b16 %v1680, %v1678
        %v1705 = vpack.c.b16 %v1681, %v1679
        %v1706 = vpack.c.b16 %v1684, %v1682
        %v1707 = vpack.c.b16 %v1685, %v1683
        %v1708 = vpack.c.b16 %v1688, %v1686
        %v1709 = vpack.c.b16 %v1689, %v1687
        %v1710 = vpack.c.b16 %v1692, %v1690
        %v1711 = vpack.c.b16 %v1693, %v1691
        %v1712 = vpack.c.b16 %v1696, %v1694
        %v1713 = vpack.c.b16 %v1697, %v1695
        %v1752 = vunpack.c.l.b16 %v1620
        %v1753 = vunpack.c.l.b16 %v1621
        %v1754 = vunpack.c.l.b16 %v1622
        %v1755 = vunpack.c.l.b16 %v1623
        %v1756 = vunpack.c.l.b16 %v1624
        %v1757 = vunpack.c.l.b16 %v1625
        %v1758 = vunpack.c.l.b16 %v1626
        %v1759 = vunpack.c.l.b16 %v1627
        %v1760 = vunpack.c.l.b16 %v1628
        %v1761 = vunpack.c.l.b16 %v1629
        %v1762 = vunpack.c.l.b16 %v1630
        %v1763 = vunpack.c.l.b16 %v1631
        %v1764 = vunpack.c.l.b16 %v1632
        %v1765 = vunpack.c.l.b16 %v1633
        %v1766 = vunpack.c.l.b16 %v1634
        %v1767 = vunpack.c.l.b16 %v1635
        %v1768 = vunpack.c.l.b16 %v1636
        %v1769 = vunpack.c.l.b16 %v1637
        %v1770 = vunpack.c.l.b16 %v1638
        %v1771 = vunpack.c.l.b16 %v1639
        %v1772 = vunpack.c.l.b16 %v1640
        %v1773 = vunpack.c.l.b16 %v1641
        %v1774 = vunpack.c.l.b16 %v1642
        %v1775 = vunpack.c.l.b16 %v1643
        %v1776 = vunpack.c.l.b16 %v1644
        %v1777 = vunpack.c.l.b16 %v1645
        %v1778 = vunpack.c.l.b16 %v1646
        %v1779 = vunpack.c.l.b16 %v1647
        %v1780 = vunpack.c.l.b16 %v1648
        %v1781 = vunpack.c.l.b16 %v1649
        %v1782 = vpack.c.b16 %v1753, %v1752
        %v1783 = vpack.c.b16 %v1755, %v1754
        %v1784 = vpack.c.b16 %v1757, %v1756
        %v1785 = vpack.c.b16 %v1759, %v1758
        %v1786 = vpack.c.b16 %v1761, %v1760
        %v1787 = vpack.c.b16 %v1763, %v1762
        %v1788 = vpack.c.b16 %v1765, %v1764
        %v1789 = vpack.c.b16 %v1767, %v1766
        %v1790 = vpack.c.b16 %v1769, %v1768
        %v1791 = vpack.c.b16 %v1771, %v1770
        %v1792 = vpack.c.b16 %v1773, %v1772
        %v1793 = vpack.c.b16 %v1775, %v1774
        %v1794 = vpack.c.b16 %v1777, %v1776
        %v1795 = vpack.c.b16 %v1779, %v1778
        %v1796 = vpack.c.b16 %v1781, %v1780
        %v1813 = vsel %vm503, %v1699, 0
        %v1816 = vsel %vm503, %v1701, 0
        %v1819 = vsel %vm503, %v1703, 0
        %v1822 = vsel %vm503, %v1705, 0
        %v1825 = vsel %vm503, %v1707, 0
        %v1828 = vsel %vm503, %v1709, 0
        %v1831 = vsel %vm503, %v1711, 0
        %v1834 = vsel %vm503, %v1713, 0
        %1836 = vmatprep.subr.bf16.mxu0 0
        %1837 = vmatpush1.bf16.msra.mxu0 %v1789
        %1838 = vmatprep.subr.bf16.mxu0 0
        %1839 = vmatpush1.bf16.msra.mxu0 %v1788
        %1840 = vmatprep.subr.bf16.mxu0 0
        %1841 = vmatpush1.bf16.msra.mxu0 %v1787
        %1842 = vmatprep.subr.bf16.mxu0 0
        %1843 = vmatpush1.bf16.msra.mxu0 %v1786
        %1844 = vmatprep.subr.bf16.mxu0 0
        %1845 = vmatpush1.bf16.msra.mxu0 %v1785
        %1846 = vmatprep.subr.bf16.mxu0 0
        %1847 = vmatpush1.bf16.msra.mxu0 %v1784
        %1848 = vmatprep.subr.bf16.mxu0 0
        %1849 = vmatpush1.bf16.msra.mxu0 %v1783
        %1850 = vmatprep.subr.bf16.mxu0 0
        %1851 = vmatpush1.bf16.msra.mxu0 %v1782
        %1852 = vmatprep.subr.bf16.mxu0 0
        %1853 = vmatpush2.bf16.msra.mxu0 0
        %1854 = vmatprep.subr.bf16.mxu0 0
        %1855 = vmatpush2.bf16.msra.mxu0 %v1796
        %1856 = vmatprep.subr.bf16.mxu0 0
        %1857 = vmatpush2.bf16.msra.mxu0 %v1795
        %1858 = vmatprep.subr.bf16.mxu0 0
        %1859 = vmatpush2.bf16.msra.mxu0 %v1794
        %1860 = vmatprep.subr.bf16.mxu0 0
        %1861 = vmatpush2.bf16.msra.mxu0 %v1793
        %1862 = vmatprep.subr.bf16.mxu0 0
        %1863 = vmatpush2.bf16.msra.mxu0 %v1792
        %1864 = vmatprep.subr.bf16.mxu0 0
        %1865 = vmatpush2.bf16.msra.mxu0 %v1791
        %1866 = vmatprep.subr.bf16.mxu0 0
        %1867 = vmatpush2.bf16.msra.mxu0 %v1790
        %1868 = vmatprep.mubr.bf16.mxu0 %v1813
        %1869 = vmatmul.mubr.bf16.gmra.mxu0 %v1698
        %v1870 = vpop.f32.mrf.mxu0
        %v1871 = vadd.f32 0.0, %v1870
        %v1872 = vpop.f32.mrf.mxu0
        %v1873 = vpop.f32.mrf.mxu0
        %v1874 = vadd.f32 0.0, %v1873
        %v1875 = vpop.f32.mrf.mxu0
        %1876 = vmatprep.mubr.bf16.mxu0 %v1816
        %1877 = vmatmul.mubr.bf16.gmra.mxu0 %v1700
        %v1878 = vpop.f32.mrf.mxu0
        %v1879 = vadd.f32 0.0, %v1878
        %v1880 = vpop.f32.mrf.mxu0
        %v1881 = vpop.f32.mrf.mxu0
        %v1882 = vadd.f32 0.0, %v1881
        %v1883 = vpop.f32.mrf.mxu0
        %1884 = vmatprep.mubr.bf16.mxu0 %v1819
        %1885 = vmatmul.mubr.bf16.gmra.mxu0 %v1702
        %v1886 = vpop.f32.mrf.mxu0
        %v1887 = vadd.f32 0.0, %v1886
        %v1888 = vpop.f32.mrf.mxu0
        %v1889 = vpop.f32.mrf.mxu0
        %v1890 = vadd.f32 0.0, %v1889
        %v1891 = vpop.f32.mrf.mxu0
        %1892 = vmatprep.mubr.bf16.mxu0 %v1822
        %1893 = vmatmul.mubr.bf16.gmra.mxu0 %v1704
        %v1894 = vpop.f32.mrf.mxu0
        %v1895 = vadd.f32 0.0, %v1894
        %v1896 = vpop.f32.mrf.mxu0
        %v1897 = vpop.f32.mrf.mxu0
        %v1898 = vadd.f32 0.0, %v1897
        %v1899 = vpop.f32.mrf.mxu0
        %1900 = vmatprep.mubr.bf16.mxu0 %v1825
        %1901 = vmatmul.mubr.bf16.gmra.mxu0 %v1706
        %v1902 = vpop.f32.mrf.mxu0
        %v1903 = vadd.f32 0.0, %v1902
        %v1904 = vpop.f32.mrf.mxu0
        %v1905 = vpop.f32.mrf.mxu0
        %v1906 = vadd.f32 0.0, %v1905
        %v1907 = vpop.f32.mrf.mxu0
        %1908 = vmatprep.mubr.bf16.mxu0 %v1828
        %1909 = vmatmul.mubr.bf16.gmra.mxu0 %v1708
        %v1910 = vpop.f32.mrf.mxu0
        %v1911 = vadd.f32 0.0, %v1910
        %v1912 = vpop.f32.mrf.mxu0
        %v1913 = vpop.f32.mrf.mxu0
        %v1914 = vadd.f32 0.0, %v1913
        %v1915 = vpop.f32.mrf.mxu0
        %1916 = vmatprep.mubr.bf16.mxu0 %v1831
        %1917 = vmatmul.mubr.bf16.gmra.mxu0 %v1710
        %v1918 = vpop.f32.mrf.mxu0
        %v1919 = vadd.f32 0.0, %v1918
        %v1920 = vpop.f32.mrf.mxu0
        %v1921 = vpop.f32.mrf.mxu0
        %v1922 = vadd.f32 0.0, %v1921
        %v1923 = vpop.f32.mrf.mxu0
        %1924 = vmatprep.mubr.bf16.mxu0 %v1834
        %1925 = vmatmul.mubr.bf16.gmra.mxu0 %v1712
        %v1926 = vpop.f32.mrf.mxu0
        %v1927 = vadd.f32 0.0, %v1926
        %v1928 = vpop.f32.mrf.mxu0
        %v1929 = vpop.f32.mrf.mxu0
        %v1930 = vadd.f32 0.0, %v1929
        %v1931 = vpop.f32.mrf.mxu0
        %1932 = vdwg.mxu0
        %v1933 = vadd.f32 %v1586, %v1871
        %v1934 = vadd.f32 %v1587, %v1874
        %v1935 = vadd.f32 %v1588, %v1879
        %v1936 = vadd.f32 %v1589, %v1882
        %v1937 = vadd.f32 %v1590, %v1887
        %v1938 = vadd.f32 %v1591, %v1890
        %v1939 = vadd.f32 %v1592, %v1895
        %v1940 = vadd.f32 %v1593, %v1898
        %v1941 = vadd.f32 %v1594, %v1903
        %v1942 = vadd.f32 %v1595, %v1906
        %v1943 = vadd.f32 %v1596, %v1911
        %v1944 = vadd.f32 %v1597, %v1914
        %v1945 = vadd.f32 %v1598, %v1919
        %v1946 = vadd.f32 %v1599, %v1922
        %v1947 = vadd.f32 %v1600, %v1927
        %v1948 = vadd.f32 %v1601, %v1930
        %v1949 = vmul.f32 %v1933, %v1933
        %v1950 = vmul.f32 %v1934, %v1934
        %v1951 = vmul.f32 %v1935, %v1935
        %v1952 = vmul.f32 %v1936, %v1936
        %v1953 = vmul.f32 %v1937, %v1937
        %v1954 = vmul.f32 %v1938, %v1938
        %v1955 = vmul.f32 %v1939, %v1939
        %v1956 = vmul.f32 %v1940, %v1940
        %v1957 = vmul.f32 %v1941, %v1941
        %v1958 = vmul.f32 %v1942, %v1942
        %v1959 = vmul.f32 %v1943, %v1943
        %v1960 = vmul.f32 %v1944, %v1944
        %v1961 = vmul.f32 %v1945, %v1945
        %v1962 = vmul.f32 %v1946, %v1946
        %v1963 = vmul.f32 %v1947, %v1947
        %v1964 = vmul.f32 %v1948, %v1948
        %v1965 = vadd.f32 %v1933, %v1934
        %v1966 = vadd.f32 %v1965, %v1935
        %v1967 = vadd.f32 %v1966, %v1936
        %v1968 = vadd.f32 %v1967, %v1937
        %v1969 = vadd.f32 %v1968, %v1938
        %v1970 = vadd.f32 %v1969, %v1939
        %v1971 = vadd.f32 %v1970, %v1940
        %v1972 = vrot.slane %v1971, 4
        %v1973 = vadd.f32 %v1971, %v1972
        %v1974 = vrot.slane %v1973, 2
        %v1975 = vadd.f32 %v1973, %v1974
        %v1976 = vrot.slane %v1975, 1
        %v1977 = vadd.f32 %v1975, %v1976
        %v1978 = vadd.f32 %v1941, %v1942
        %v1979 = vadd.f32 %v1978, %v1943
        %v1980 = vadd.f32 %v1979, %v1944
        %v1981 = vadd.f32 %v1980, %v1945
        %v1982 = vadd.f32 %v1981, %v1946
        %v1983 = vadd.f32 %v1982, %v1947
        %v1984 = vadd.f32 %v1983, %v1948
        %v1985 = vrot.slane %v1984, 4
        %v1986 = vadd.f32 %v1984, %v1985
        %v1987 = vrot.slane %v1986, 2
        %v1988 = vadd.f32 %v1986, %v1987
        %v1989 = vrot.slane %v1988, 1
        %v1990 = vadd.f32 %v1988, %v1989
        %v1991 = vadd.f32 %v1949, %v1950
        %v1992 = vadd.f32 %v1991, %v1951
        %v1993 = vadd.f32 %v1992, %v1952
        %v1994 = vadd.f32 %v1993, %v1953
        %v1995 = vadd.f32 %v1994, %v1954
        %v1996 = vadd.f32 %v1995, %v1955
        %v1997 = vadd.f32 %v1996, %v1956
        %v1998 = vrot.slane %v1997, 4
        %v1999 = vadd.f32 %v1997, %v1998
        %v2000 = vrot.slane %v1999, 2
        %v2001 = vadd.f32 %v1999, %v2000
        %v2002 = vrot.slane %v2001, 1
        %v2003 = vadd.f32 %v2001, %v2002
        %v2004 = vadd.f32 %v1957, %v1958
        %v2005 = vadd.f32 %v2004, %v1959
        %v2006 = vadd.f32 %v2005, %v1960
        %v2007 = vadd.f32 %v2006, %v1961
        %v2008 = vadd.f32 %v2007, %v1962
        %v2009 = vadd.f32 %v2008, %v1963
        %v2010 = vadd.f32 %v2009, %v1964
        %v2011 = vrot.slane %v2010, 4
        %v2012 = vadd.f32 %v2010, %v2011
        %v2013 = vrot.slane %v2012, 2
        %v2014 = vadd.f32 %v2012, %v2013
        %v2015 = vrot.slane %v2014, 1
        %v2016 = vadd.f32 %v2014, %v2015
        %vm2017 = vcmask 1040384
        %v2018 = vsel %vm2017, %v1977, %v1990
        %vm2019 = vcmask 1041408
        %v2020 = vsel %vm2019, %v2018, %v2003
        %vm2021 = vcmask 1042432
        %v2022 = vsel %vm2021, %v2020, %v2016
        %2023 = vrot.lane.b32.xlu0 %v2022, 16
        %v2024 = vpop.permute.xlu0 %2023
        %v2025 = vadd.f32 %v2022, %v2024
        %2026 = vrot.lane.b32.xlu0 %v2025, 32
        %v2027 = vpop.permute.xlu0 %2026
        %v2028 = vadd.f32 %v2025, %v2027
        %2029 = vrot.lane.b32.xlu0 %v2028, 64
        %v2030 = vpop.permute.xlu0 %2029
        %v2031 = vadd.f32 %v2028, %v2030
        %v2032 = vmul.f32 %v2031, 0.001953125
        %v2033 = vmul.f32 %v2032, %v2032
        %v2035 = vrot.slane %v2033, 6
        %v2037 = vsub.f32 %v2032, %v2035
        %v2038 = vadd.f32 %v2037, 1e-05
        %v2039 = vrsqrt.pop %v2038
        %v2040 = vlaneseq
        %v2041 = vshrl.u32 %v2040, 7
        %v2042 = vsub.s32 0, %v2041
        %v2043 = vrot.slane %v2032, %v2042
        %v2044 = vsub.f32 %v1933, %v2043
        %v2045 = vsub.f32 %v1934, %v2043
        %v2046 = vsub.f32 %v1935, %v2043
        %v2047 = vsub.f32 %v1936, %v2043
        %v2048 = vsub.f32 %v1937, %v2043
        %v2049 = vsub.f32 %v1938, %v2043
        %v2050 = vsub.f32 %v1939, %v2043
        %v2051 = vsub.f32 %v1940, %v2043
        %v2052 = vlaneseq
        %v2053 = vshrl.u32 %v2052, 7
        %v2054 = vsub.s32 2, %v2053
        %v2055 = vrot.slane %v2039, %v2054
        %v2056 = vmul.f32 %v2044, %v2055
        %v2057 = vmul.f32 %v2045, %v2055
        %v2058 = vmul.f32 %v2046, %v2055
        %v2059 = vmul.f32 %v2047, %v2055
        %v2060 = vmul.f32 %v2048, %v2055
        %v2061 = vmul.f32 %v2049, %v2055
        %v2062 = vmul.f32 %v2050, %v2055
        %v2063 = vmul.f32 %v2051, %v2055
        %v2064 = vld [vmem:[%s215] sm:$0xff]
        %v2065 = vld [vmem:[%s215 + $0x8] sm:$0xff]
        %v2066 = vld [vmem:[%s215 + $0x10] sm:$0xff]
        %v2067 = vld [vmem:[%s215 + $0x18] sm:$0xff]
        %v2068 = vld [vmem:[%s215 + $0x20] sm:$0xff]
        %v2069 = vld [vmem:[%s215 + $0x28] sm:$0xff]
        %v2070 = vld [vmem:[%s215 + $0x30] sm:$0xff]
        %v2071 = vld [vmem:[%s215 + $0x38] sm:$0xff]
        %v2072 = vadd.f32 %v2056, %v2064
        %v2073 = vadd.f32 %v2057, %v2065
        %v2074 = vadd.f32 %v2058, %v2066
        %v2075 = vadd.f32 %v2059, %v2067
        %v2076 = vadd.f32 %v2060, %v2068
        %v2077 = vadd.f32 %v2061, %v2069
        %v2078 = vadd.f32 %v2062, %v2070
        %v2079 = vadd.f32 %v2063, %v2071
        %v2080 = vmax.f32 %v2072, 0.0
        %v2081 = vmax.f32 %v2073, 0.0
        %v2082 = vmax.f32 %v2074, 0.0
        %v2083 = vmax.f32 %v2075, 0.0
        %v2084 = vmax.f32 %v2076, 0.0
        %v2085 = vmax.f32 %v2077, 0.0
        %v2086 = vmax.f32 %v2078, 0.0
        %v2087 = vmax.f32 %v2079, 0.0
        %2088 = vst [vmem:[%s242] sm:$0xff] %v2080
        %2089 = vst [vmem:[%s242 + $0x8] sm:$0xff] %v2081
        %2090 = vst [vmem:[%s242 + $0x10] sm:$0xff] %v2082
        %2091 = vst [vmem:[%s242 + $0x18] sm:$0xff] %v2083
        %2092 = vst [vmem:[%s242 + $0x20] sm:$0xff] %v2084
        %2093 = vst [vmem:[%s242 + $0x28] sm:$0xff] %v2085
        %2094 = vst [vmem:[%s242 + $0x30] sm:$0xff] %v2086
        %2095 = vst [vmem:[%s242 + $0x38] sm:$0xff] %v2087
        %v2096 = vlaneseq
        %v2097 = vshrl.u32 %v2096, 7
        %v2098 = vsub.s32 1, %v2097
        %v2099 = vrot.slane %v2032, %v2098
        %v2100 = vsub.f32 %v1941, %v2099
        %v2101 = vsub.f32 %v1942, %v2099
        %v2102 = vsub.f32 %v1943, %v2099
        %v2103 = vsub.f32 %v1944, %v2099
        %v2104 = vsub.f32 %v1945, %v2099
        %v2105 = vsub.f32 %v1946, %v2099
        %v2106 = vsub.f32 %v1947, %v2099
        %v2107 = vsub.f32 %v1948, %v2099
        %v2108 = vlaneseq
        %v2109 = vshrl.u32 %v2108, 7
        %v2110 = vsub.s32 3, %v2109
        %v2111 = vrot.slane %v2039, %v2110
        %v2112 = vmul.f32 %v2100, %v2111
        %v2113 = vmul.f32 %v2101, %v2111
        %v2114 = vmul.f32 %v2102, %v2111
        %v2115 = vmul.f32 %v2103, %v2111
        %v2116 = vmul.f32 %v2104, %v2111
        %v2117 = vmul.f32 %v2105, %v2111
        %v2118 = vmul.f32 %v2106, %v2111
        %v2119 = vmul.f32 %v2107, %v2111
        %s2120 = scalar_lea.vmem %s215, 64 [#allocation7]
        %v2121 = vld [vmem:[%s2120] sm:$0xff]
        %v2122 = vld [vmem:[%s2120 + $0x8] sm:$0xff]
        %v2123 = vld [vmem:[%s2120 + $0x10] sm:$0xff]
        %v2124 = vld [vmem:[%s2120 + $0x18] sm:$0xff]
        %v2125 = vld [vmem:[%s2120 + $0x20] sm:$0xff]
        %v2126 = vld [vmem:[%s2120 + $0x28] sm:$0xff]
        %v2127 = vld [vmem:[%s2120 + $0x30] sm:$0xff]
        %v2128 = vld [vmem:[%s2120 + $0x38] sm:$0xff]
        %v2129 = vadd.f32 %v2112, %v2121
        %v2130 = vadd.f32 %v2113, %v2122
        %v2131 = vadd.f32 %v2114, %v2123
        %v2132 = vadd.f32 %v2115, %v2124
        %v2133 = vadd.f32 %v2116, %v2125
        %v2134 = vadd.f32 %v2117, %v2126
        %v2135 = vadd.f32 %v2118, %v2127
        %v2136 = vadd.f32 %v2119, %v2128
        %v2137 = vmax.f32 %v2129, 0.0
        %v2138 = vmax.f32 %v2130, 0.0
        %v2139 = vmax.f32 %v2131, 0.0
        %v2140 = vmax.f32 %v2132, 0.0
        %v2141 = vmax.f32 %v2133, 0.0
        %v2142 = vmax.f32 %v2134, 0.0
        %v2143 = vmax.f32 %v2135, 0.0
        %v2144 = vmax.f32 %v2136, 0.0
        %s2145 = scalar_lea.vmem %s242, 64 [#allocation8]
        %2146 = vst [vmem:[%s2145] sm:$0xff] %v2137
        %2147 = vst [vmem:[%s2145 + $0x8] sm:$0xff] %v2138
        %2148 = vst [vmem:[%s2145 + $0x10] sm:$0xff] %v2139
        %2149 = vst [vmem:[%s2145 + $0x18] sm:$0xff] %v2140
        %2150 = vst [vmem:[%s2145 + $0x20] sm:$0xff] %v2141
        %2151 = vst [vmem:[%s2145 + $0x28] sm:$0xff] %v2142
        %2152 = vst [vmem:[%s2145 + $0x30] sm:$0xff] %v2143
        %2153 = vst [vmem:[%s2145 + $0x38] sm:$0xff] %v2144
        %s2154 = sand.u32 %s102, 1
        %s2155 = scalar_lea.sflag [#allocation4], %s2154
        %s2156 = sand.u32 %s102, 1
        %s2157 = smul.addr %s2156, 128
        %s2158 = scalar_lea.vmem [#allocation8], %s2157
        // Predicated region
        $region45: #{tpu_custom_call.1} parent=31 // pred_check
          %p2159 = pneg %p112
        $region46: #{tpu_custom_call.1} parent=31 // pred_check_branch
          %2161 = sbr.rel (%p2159) target = $region48
        $region47: #{tpu_custom_call.1} parent=31 // pred_region
          %s2162 = smul.u32 2, %s21
          %s2164 = ssub.s32 2048, 2048
          %2165 = vsyncadd %s2155, %s2164
          %s2166 = smul.addr %s2162, 8
          %s2167 = smul.addr %s2166, 128
          %s2168 = scalar_lea.hbm %s3, %s2167
          %s2169 = sshll.u32 %s2158, 4
          %s2170 = int_to_ptr.vmem [resolvable:$true] %s2169
          %2175 = dma.vmem_to_hbm [thread:$0]  %s2170, 2048, %s2168, %s2155, 128, 128, 8
        $region48: #{tpu_custom_call.1} parent=31 // pred_fallthru
          _
      $region32: #{tpu_custom_call.1} parent=5 // pred_fallthru
        _
      %p2176 = scmp.le.s32.totalorder 2, %s16
      // Predicated region
      $region49: #{tpu_custom_call.1} parent=5 // pred_check
        %p2177 = pneg %p2176
      $region50: #{tpu_custom_call.1} parent=5 // pred_check_branch
        %2179 = sbr.rel (%p2177) target = $region52
      $region51: #{tpu_custom_call.1} parent=5 // pred_region
        %s2180 = ssub.s32 %s16, 2
        // Predicated region
        $region53: #{tpu_custom_call.1} parent=51 // pred_check
          %p2181 = pneg %p118
        $region54: #{tpu_custom_call.1} parent=51 // pred_check_branch
          %2183 = sbr.rel (%p2181) target = $region56
        $region55: #{tpu_custom_call.1} parent=51 // pred_region
          %s2184 = sand.u32 %s103, 1
          %s2185 = scalar_lea.sflag [#allocation4], %s2184
          %s2186 = sand.u32 %s103, 1
          %s2187 = smul.addr %s2186, 128
          %s2188 = scalar_lea.vmem [#allocation8], %s2187
          %2189 = dma.done %s2185, 2048
        $region56: #{tpu_custom_call.1} parent=51 // pred_fallthru
          _
      $region52: #{tpu_custom_call.1} parent=5 // pred_fallthru
        _
    $region6: #{tpu_custom_call.1} parent=1 // loop_footer
      %s20 = sadd.s32 1, %s16
    $region7: #{tpu_custom_call.1} parent=1 // loop_footer_branch
      %15 = sbr.rel target = $region3
    $region8: #{tpu_custom_call.1} parent=1 // loop_exit
      _
    %2190 = vsyncpa [#allocation3], 1
    %s2191 = scalar_lea.sflag [#allocation3], 1
    %2192 = vsyncpa %s2191, 1
    %2193 = vsyncpa [#allocation6], 1
    %2194 = vsyncpa [#allocation4], 1
    %s2195 = scalar_lea.sflag [#allocation4], 1
    %2196 = vsyncpa %s2195, 1

</llo_original>
